<compile_context>
chip_gen: v6e
topology: v6e:2x2x1
jax: 0.10.0
libtpu: 0.0.40
codegen_flags: <defaults>
</compile_context>

<pallas_src>
import numpy as np
import jax
import jax.numpy as jnp
from jax.experimental import pallas as pl
from jax.experimental.pallas import tpu as pltpu

EPS = 1e-5        # InstanceNorm3d default eps
SLOPE = 0.3       # LeakyReLU negative slope


def _leaky(v):
    return jnp.where(v >= 0, v, SLOPE * v)


def _inorm_rows(v):
    # v: (F, S) -- normalize each row (channel) over the spatial (lane) axis,
    # biased variance, no affine (InstanceNorm3d defaults). Centered tensor is
    # hoisted so (v - mean) is computed once.
    c = v - jnp.mean(v, axis=1, keepdims=True)
    var = jnp.mean(c * c, axis=1, keepdims=True)
    return c * jax.lax.rsqrt(var + EPS)


def reduction_kernel(x_ref, wk_ref, w2a_ref, w2c_ref, o_ref):
    # x_ref : (8, C, S) bf16  -- 8 window-offset slabs (k = kd*4 + kh*2 + kw),
    #                            lanes = flattened output spatial S.
    # wk_ref: (8, 8+C, C) bf16 -- per-offset [w1_k ; 0.125*w2b] stacked weights.
    # w2a_ref: (C, C) f32      -- 1x1x1 conv weights for the max-pool channels.
    # w2c_ref: (C, 8) f32      -- 1x1x1 conv weights for the conv channels.
    # o_ref : (C, S) f32
    C = o_ref.shape[0]
    xall = x_ref[...]                       # (8, C, S) bf16
    wk = wk_ref[...]                        # (8, 8+C, C) bf16

    # MaxPool3d (k=2, s=2): elementwise max over the 8 aligned window slabs.
    mx = xall[0]
    for k in range(1, 8):
        mx = jnp.maximum(mx, xall[k])
    mx = mx.astype(jnp.float32)             # (C, S)

    # Fused MXU pass over the 8 slabs:
    #   rows 0..7      -> strided Conv3d(C->8, k=2, s=2) pre-activation
    #   rows 8..8+C-1  -> w2b @ avg_pool  (weights pre-scaled by 1/8)
    # (b1 is inert under the following biased, non-affine InstanceNorm.)
    t = jnp.dot(wk[0], xall[0], preferred_element_type=jnp.float32)
    for k in range(1, 8):
        t = t + jnp.dot(wk[k], xall[k], preferred_element_type=jnp.float32)
    cv = _leaky(_inorm_rows(t[:8, :]))      # (8, S)
    avg_contrib = t[8:, :]                  # (C, S) == w2b @ avg_pool

    # 1x1x1 Conv over concat([max, avg, conv]) as split matmuls
    # (b2 is likewise inert under the final InstanceNorm).
    y = (jnp.dot(w2a_ref[...], mx, preferred_element_type=jnp.float32)
         + avg_contrib
         + jnp.dot(w2c_ref[...], cv, preferred_element_type=jnp.float32))
    o_ref[...] = _leaky(_inorm_rows(y))


def _pick_vmem_limit():
    # ~3/4 of physical VMEM: ~48 MiB on v7x (64 MiB phys), ~96 MiB on v5e/v6e
    # (128 MiB phys) -- leaves headroom for double-buffers / compiler scratch.
    try:
        cap = int(pltpu.get_tpu_info().vmem_capacity_bytes)
        if cap > 0:
            return (cap * 3) // 4
    except Exception:
        pass
    return 48 * 1024 * 1024


def reduction_forward(x, w1, b1, w2, b2):
    """x: (N, C, D, H, W) NCDHW float32. Returns (N, C, D/2, H/2, W/2) float32."""
    N, C, D, H, W = x.shape
    assert D % 2 == 0 and H % 2 == 0 and W % 2 == 0, "even D/H/W required"
    Do, Ho, Wo = D // 2, H // 2, W // 2
    S = Do * Ho * Wo
    CC = 2 * C + 8

    # Patch tensor, window-offset-major slabs with spatial lanes: (N, 8, C, S).
    # Shipped in bf16 (transport only; all accumulation stays f32).
    xr = x.reshape(N, C, Do, 2, Ho, 2, Wo, 2)
    xp = jnp.transpose(xr, (0, 3, 5, 7, 1, 2, 4, 6)).reshape(N, 8, C, S)
    xp = xp.astype(jnp.bfloat16)

    # Per-offset combined weight (8, 8+C, C):
    #   rows 0..7     : strided conv weight for window offset k = kd*4+kh*2+kw
    #   rows 8..8+C-1 : (1/8) * w2b  (folds the avg-pool branch into the MXU)
    w1_k = jnp.transpose(w1, (2, 3, 4, 0, 1)).reshape(8, 8, C)      # (k, o, c)
    w2m = w2.reshape(C, CC)
    w2a = w2m[:, 0:C]                       # multiplies max-pool channels
    w2b = w2m[:, C:2 * C]                   # multiplies avg-pool channels
    w2c = w2m[:, 2 * C:]                    # multiplies conv channels (8)
    wk = jnp.concatenate(
        [w1_k, jnp.broadcast_to((0.125 * w2b)[None], (8, C, C))], axis=1
    ).astype(jnp.bfloat16)                  # (8, 8+C, C)
    # b1/b2 are exactly cancelled by the biased, non-affine InstanceNorms.
    del b1, b2

    out = pl.pallas_call(
        reduction_kernel,
        out_shape=jax.ShapeDtypeStruct((N, C, S), jnp.float32),
        grid_spec=pltpu.PrefetchScalarGridSpec(
            num_scalar_prefetch=0,
            grid=(N,),
            in_specs=[
                pl.BlockSpec((None, 8, C, S), lambda n: (n, 0, 0, 0)),
                pl.BlockSpec((8, 8 + C, C), lambda n: (0, 0, 0)),
                pl.BlockSpec((C, C), lambda n: (0, 0)),
                pl.BlockSpec((C, 8), lambda n: (0, 0)),
            ],
            out_specs=pl.BlockSpec((None, C, S), lambda n: (n, 0, 0)),
        ),
        compiler_params=pltpu.CompilerParams(
            dimension_semantics=("parallel",),
            vmem_limit_bytes=_pick_vmem_limit()),
    )(xp, wk, w2a, w2c)

    # (N, C, S) is already NCDHW order -> free reshape, no transpose.
    return out.reshape(N, C, Do, Ho, Wo)


def _reference(x, w1, b1, w2, b2):
    # Independent pure-JAX (f32) reference mirroring the PyTorch math.
    N, C, D, H, W = x.shape
    Do, Ho, Wo = D // 2, H // 2, W // 2
    xr = x.reshape(N, C, Do, 2, Ho, 2, Wo, 2)
    xp = jnp.transpose(xr, (0, 1, 2, 4, 6, 3, 5, 7))   # (N,C,Do,Ho,Wo,kd,kh,kw)

    def inorm(v):
        m = jnp.mean(v, axis=(2, 3, 4), keepdims=True)
        var = jnp.mean((v - m) ** 2, axis=(2, 3, 4), keepdims=True)
        return (v - m) * jax.lax.rsqrt(var + EPS)

    mx = jnp.max(xp, axis=(5, 6, 7))
    av = jnp.mean(xp, axis=(5, 6, 7))
    cv = jnp.einsum('ncdhwijk,ocijk->nodhw', xp, w1) + b1[None, :, None, None, None]
    cv = _leaky(inorm(cv))
    cat = jnp.concatenate([mx, av, cv], axis=1)
    w2m = w2.reshape(C, 2 * C + 8)
    y = jnp.einsum('oc,ncdhw->nodhw', w2m, cat) + b2[None, :, None, None, None]
    return _leaky(inorm(y))


if __name__ == "__main__":
    # Small shapes: batch=2, channels=4, spatial 16x16x16 (even; S = 512 lanes).
    N, C, D, H, W = 2, 4, 16, 16, 16
    key = jax.random.PRNGKey(0)
    kx, k1, k2, k3 = jax.random.split(key, 4)

    x = jax.random.normal(kx, (N, C, D, H, W), dtype=jnp.float32)

    # Strided Conv3d(C -> 8, k=2, s=2) params (PyTorch-default-style uniform init).
    fan_in1 = C * 8
    bound1 = float(1.0 / np.sqrt(fan_in1))
    w1 = jax.random.uniform(k1, (8, C, 2, 2, 2), jnp.float32, -bound1, bound1)
    b1 = jax.random.uniform(k2, (8,), jnp.float32, -bound1, bound1)

    # 1x1x1 Conv3d(2C+8 -> C), xavier_uniform weight, zero bias (as in forward()).
    CC = 2 * C + 8
    bound2 = float(np.sqrt(6.0 / (CC + C)))
    w2 = jax.random.uniform(k3, (C, CC, 1, 1, 1), jnp.float32, -bound2, bound2)
    b2 = jnp.zeros((C,), dtype=jnp.float32)

    out = jax.block_until_ready(reduction_forward(x, w1, b1, w2, b2))
    assert out.shape == (N, C, D // 2, H // 2, W // 2), out.shape

    ref = jax.block_until_ready(_reference(x, w1, b1, w2, b2))
    # bf16 transport of the patch tensor -> slightly looser atol than pure f32.
    np.testing.assert_allclose(np.asarray(out), np.asarray(ref), rtol=2e-2, atol=4e-2)

    print("KERNEL_OK")
</pallas_src>

<mosaic_0001>
module attributes {stable_mosaic.version = 11 : i64} {
  func.func @reduction_kernel(%arg0: i32, %arg1: memref<1x8x4x512xbf16, #tpu.memory_space<vmem>>, %arg2: memref<8x12x4xbf16, #tpu.memory_space<vmem>>, %arg3: memref<4x4xf32, #tpu.memory_space<vmem>>, %arg4: memref<4x8xf32, #tpu.memory_space<vmem>>, %arg5: memref<1x4x512xf32, #tpu.memory_space<vmem>>) attributes {dimension_semantics = [#tpu.dimension_semantics<parallel>], iteration_bounds = array<i64: 2>, scalar_prefetch = 0 : i64, scratch_operands = 0 : i64, tpu.core_type = #tpu.core_type<tc>, window_params = [{transform_indices = @transform_0, window_bounds = array<i64: 1, 8, 4, 512>}, {pipeline_mode = #tpu.pipeline_mode<synchronous>, transform_indices = @transform_1, window_bounds = array<i64: 8, 12, 4>}, {pipeline_mode = #tpu.pipeline_mode<synchronous>, transform_indices = @transform_2, window_bounds = array<i64: 4, 4>}, {pipeline_mode = #tpu.pipeline_mode<synchronous>, transform_indices = @transform_3, window_bounds = array<i64: 4, 8>}, {transform_indices = @transform_4, window_bounds = array<i64: 1, 4, 512>}]} {
    %c0 = arith.constant 0 : index
    %c0_0 = arith.constant 0 : index
    %c0_1 = arith.constant 0 : index
    %c0_2 = arith.constant 0 : index
    %0 = vector.load %arg1[%c0, %c0_0, %c0_1, %c0_2] : memref<1x8x4x512xbf16, #tpu.memory_space<vmem>>, vector<1x8x4x512xbf16>
    %1 = vector.shape_cast %0 : vector<1x8x4x512xbf16> to vector<8x4x512xbf16>
    %c0_3 = arith.constant 0 : index
    %c0_4 = arith.constant 0 : index
    %c0_5 = arith.constant 0 : index
    %2 = vector.load %arg2[%c0_3, %c0_4, %c0_5] : memref<8x12x4xbf16, #tpu.memory_space<vmem>>, vector<8x12x4xbf16>
    %3 = vector.extract_strided_slice %1 {offsets = [0, 0, 0], sizes = [1, 4, 512], strides = [1, 1, 1]} : vector<8x4x512xbf16> to vector<1x4x512xbf16>
    %4 = vector.shape_cast %3 : vector<1x4x512xbf16> to vector<4x512xbf16>
    %5 = vector.extract_strided_slice %1 {offsets = [1, 0, 0], sizes = [1, 4, 512], strides = [1, 1, 1]} : vector<8x4x512xbf16> to vector<1x4x512xbf16>
    %6 = vector.shape_cast %5 : vector<1x4x512xbf16> to vector<4x512xbf16>
    %7 = arith.maximumf %4, %6 : vector<4x512xbf16>
    %8 = vector.extract_strided_slice %1 {offsets = [2, 0, 0], sizes = [1, 4, 512], strides = [1, 1, 1]} : vector<8x4x512xbf16> to vector<1x4x512xbf16>
    %9 = vector.shape_cast %8 : vector<1x4x512xbf16> to vector<4x512xbf16>
    %10 = arith.maximumf %7, %9 : vector<4x512xbf16>
    %11 = vector.extract_strided_slice %1 {offsets = [3, 0, 0], sizes = [1, 4, 512], strides = [1, 1, 1]} : vector<8x4x512xbf16> to vector<1x4x512xbf16>
    %12 = vector.shape_cast %11 : vector<1x4x512xbf16> to vector<4x512xbf16>
    %13 = arith.maximumf %10, %12 : vector<4x512xbf16>
    %14 = vector.extract_strided_slice %1 {offsets = [4, 0, 0], sizes = [1, 4, 512], strides = [1, 1, 1]} : vector<8x4x512xbf16> to vector<1x4x512xbf16>
    %15 = vector.shape_cast %14 : vector<1x4x512xbf16> to vector<4x512xbf16>
    %16 = arith.maximumf %13, %15 : vector<4x512xbf16>
    %17 = vector.extract_strided_slice %1 {offsets = [5, 0, 0], sizes = [1, 4, 512], strides = [1, 1, 1]} : vector<8x4x512xbf16> to vector<1x4x512xbf16>
    %18 = vector.shape_cast %17 : vector<1x4x512xbf16> to vector<4x512xbf16>
    %19 = arith.maximumf %16, %18 : vector<4x512xbf16>
    %20 = vector.extract_strided_slice %1 {offsets = [6, 0, 0], sizes = [1, 4, 512], strides = [1, 1, 1]} : vector<8x4x512xbf16> to vector<1x4x512xbf16>
    %21 = vector.shape_cast %20 : vector<1x4x512xbf16> to vector<4x512xbf16>
    %22 = arith.maximumf %19, %21 : vector<4x512xbf16>
    %23 = vector.extract_strided_slice %1 {offsets = [7, 0, 0], sizes = [1, 4, 512], strides = [1, 1, 1]} : vector<8x4x512xbf16> to vector<1x4x512xbf16>
    %24 = vector.shape_cast %23 : vector<1x4x512xbf16> to vector<4x512xbf16>
    %25 = arith.maximumf %22, %24 : vector<4x512xbf16>
    %26 = arith.extf %25 : vector<4x512xbf16> to vector<4x512xf32>
    %27 = vector.extract_strided_slice %2 {offsets = [0, 0, 0], sizes = [1, 12, 4], strides = [1, 1, 1]} : vector<8x12x4xbf16> to vector<1x12x4xbf16>
    %28 = vector.shape_cast %27 : vector<1x12x4xbf16> to vector<12x4xbf16>
    %29 = vector.extract_strided_slice %1 {offsets = [0, 0, 0], sizes = [1, 4, 512], strides = [1, 1, 1]} : vector<8x4x512xbf16> to vector<1x4x512xbf16>
    %30 = vector.shape_cast %29 : vector<1x4x512xbf16> to vector<4x512xbf16>
    %cst = arith.constant dense<0.000000e+00> : vector<12x512xf32>
    %31 = tpu.matmul %28, %30, %cst {dimension_numbers = #tpu.dot_dimension_numbers<[1], [0], [0], [1], [0, 0, 1, 1], [], []>} : vector<12x4xbf16>, vector<4x512xbf16>, vector<12x512xf32> -> vector<12x512xf32>
    %32 = vector.extract_strided_slice %2 {offsets = [1, 0, 0], sizes = [1, 12, 4], strides = [1, 1, 1]} : vector<8x12x4xbf16> to vector<1x12x4xbf16>
    %33 = vector.shape_cast %32 : vector<1x12x4xbf16> to vector<12x4xbf16>
    %34 = vector.extract_strided_slice %1 {offsets = [1, 0, 0], sizes = [1, 4, 512], strides = [1, 1, 1]} : vector<8x4x512xbf16> to vector<1x4x512xbf16>
    %35 = vector.shape_cast %34 : vector<1x4x512xbf16> to vector<4x512xbf16>
    %cst_6 = arith.constant dense<0.000000e+00> : vector<12x512xf32>
    %36 = tpu.matmul %33, %35, %cst_6 {dimension_numbers = #tpu.dot_dimension_numbers<[1], [0], [0], [1], [0, 0, 1, 1], [], []>} : vector<12x4xbf16>, vector<4x512xbf16>, vector<12x512xf32> -> vector<12x512xf32>
    %37 = arith.addf %31, %36 : vector<12x512xf32>
    %38 = vector.extract_strided_slice %2 {offsets = [2, 0, 0], sizes = [1, 12, 4], strides = [1, 1, 1]} : vector<8x12x4xbf16> to vector<1x12x4xbf16>
    %39 = vector.shape_cast %38 : vector<1x12x4xbf16> to vector<12x4xbf16>
    %40 = vector.extract_strided_slice %1 {offsets = [2, 0, 0], sizes = [1, 4, 512], strides = [1, 1, 1]} : vector<8x4x512xbf16> to vector<1x4x512xbf16>
    %41 = vector.shape_cast %40 : vector<1x4x512xbf16> to vector<4x512xbf16>
    %cst_7 = arith.constant dense<0.000000e+00> : vector<12x512xf32>
    %42 = tpu.matmul %39, %41, %cst_7 {dimension_numbers = #tpu.dot_dimension_numbers<[1], [0], [0], [1], [0, 0, 1, 1], [], []>} : vector<12x4xbf16>, vector<4x512xbf16>, vector<12x512xf32> -> vector<12x512xf32>
    %43 = arith.addf %37, %42 : vector<12x512xf32>
    %44 = vector.extract_strided_slice %2 {offsets = [3, 0, 0], sizes = [1, 12, 4], strides = [1, 1, 1]} : vector<8x12x4xbf16> to vector<1x12x4xbf16>
    %45 = vector.shape_cast %44 : vector<1x12x4xbf16> to vector<12x4xbf16>
    %46 = vector.extract_strided_slice %1 {offsets = [3, 0, 0], sizes = [1, 4, 512], strides = [1, 1, 1]} : vector<8x4x512xbf16> to vector<1x4x512xbf16>
    %47 = vector.shape_cast %46 : vector<1x4x512xbf16> to vector<4x512xbf16>
    %cst_8 = arith.constant dense<0.000000e+00> : vector<12x512xf32>
    %48 = tpu.matmul %45, %47, %cst_8 {dimension_numbers = #tpu.dot_dimension_numbers<[1], [0], [0], [1], [0, 0, 1, 1], [], []>} : vector<12x4xbf16>, vector<4x512xbf16>, vector<12x512xf32> -> vector<12x512xf32>
    %49 = arith.addf %43, %48 : vector<12x512xf32>
    %50 = vector.extract_strided_slice %2 {offsets = [4, 0, 0], sizes = [1, 12, 4], strides = [1, 1, 1]} : vector<8x12x4xbf16> to vector<1x12x4xbf16>
    %51 = vector.shape_cast %50 : vector<1x12x4xbf16> to vector<12x4xbf16>
    %52 = vector.extract_strided_slice %1 {offsets = [4, 0, 0], sizes = [1, 4, 512], strides = [1, 1, 1]} : vector<8x4x512xbf16> to vector<1x4x512xbf16>
    %53 = vector.shape_cast %52 : vector<1x4x512xbf16> to vector<4x512xbf16>
    %cst_9 = arith.constant dense<0.000000e+00> : vector<12x512xf32>
    %54 = tpu.matmul %51, %53, %cst_9 {dimension_numbers = #tpu.dot_dimension_numbers<[1], [0], [0], [1], [0, 0, 1, 1], [], []>} : vector<12x4xbf16>, vector<4x512xbf16>, vector<12x512xf32> -> vector<12x512xf32>
    %55 = arith.addf %49, %54 : vector<12x512xf32>
    %56 = vector.extract_strided_slice %2 {offsets = [5, 0, 0], sizes = [1, 12, 4], strides = [1, 1, 1]} : vector<8x12x4xbf16> to vector<1x12x4xbf16>
    %57 = vector.shape_cast %56 : vector<1x12x4xbf16> to vector<12x4xbf16>
    %58 = vector.extract_strided_slice %1 {offsets = [5, 0, 0], sizes = [1, 4, 512], strides = [1, 1, 1]} : vector<8x4x512xbf16> to vector<1x4x512xbf16>
    %59 = vector.shape_cast %58 : vector<1x4x512xbf16> to vector<4x512xbf16>
    %cst_10 = arith.constant dense<0.000000e+00> : vector<12x512xf32>
    %60 = tpu.matmul %57, %59, %cst_10 {dimension_numbers = #tpu.dot_dimension_numbers<[1], [0], [0], [1], [0, 0, 1, 1], [], []>} : vector<12x4xbf16>, vector<4x512xbf16>, vector<12x512xf32> -> vector<12x512xf32>
    %61 = arith.addf %55, %60 : vector<12x512xf32>
    %62 = vector.extract_strided_slice %2 {offsets = [6, 0, 0], sizes = [1, 12, 4], strides = [1, 1, 1]} : vector<8x12x4xbf16> to vector<1x12x4xbf16>
    %63 = vector.shape_cast %62 : vector<1x12x4xbf16> to vector<12x4xbf16>
    %64 = vector.extract_strided_slice %1 {offsets = [6, 0, 0], sizes = [1, 4, 512], strides = [1, 1, 1]} : vector<8x4x512xbf16> to vector<1x4x512xbf16>
    %65 = vector.shape_cast %64 : vector<1x4x512xbf16> to vector<4x512xbf16>
    %cst_11 = arith.constant dense<0.000000e+00> : vector<12x512xf32>
    %66 = tpu.matmul %63, %65, %cst_11 {dimension_numbers = #tpu.dot_dimension_numbers<[1], [0], [0], [1], [0, 0, 1, 1], [], []>} : vector<12x4xbf16>, vector<4x512xbf16>, vector<12x512xf32> -> vector<12x512xf32>
    %67 = arith.addf %61, %66 : vector<12x512xf32>
    %68 = vector.extract_strided_slice %2 {offsets = [7, 0, 0], sizes = [1, 12, 4], strides = [1, 1, 1]} : vector<8x12x4xbf16> to vector<1x12x4xbf16>
    %69 = vector.shape_cast %68 : vector<1x12x4xbf16> to vector<12x4xbf16>
    %70 = vector.extract_strided_slice %1 {offsets = [7, 0, 0], sizes = [1, 4, 512], strides = [1, 1, 1]} : vector<8x4x512xbf16> to vector<1x4x512xbf16>
    %71 = vector.shape_cast %70 : vector<1x4x512xbf16> to vector<4x512xbf16>
    %cst_12 = arith.constant dense<0.000000e+00> : vector<12x512xf32>
    %72 = tpu.matmul %69, %71, %cst_12 {dimension_numbers = #tpu.dot_dimension_numbers<[1], [0], [0], [1], [0, 0, 1, 1], [], []>} : vector<12x4xbf16>, vector<4x512xbf16>, vector<12x512xf32> -> vector<12x512xf32>
    %73 = arith.addf %67, %72 : vector<12x512xf32>
    %74 = vector.extract_strided_slice %73 {offsets = [0, 0], sizes = [8, 512], strides = [1, 1]} : vector<12x512xf32> to vector<8x512xf32>
    %cst_13 = arith.constant dense<0.000000e+00> : vector<8xf32>
    %75 = vector.multi_reduction <add>, %74, %cst_13 [1] : vector<8x512xf32> to vector<8xf32>
    %76 = vector.shape_cast %75 : vector<8xf32> to vector<8x1xf32>
    %cst_14 = arith.constant 5.120000e+02 : f32
    %77 = vector.broadcast %cst_14 : f32 to vector<8x1xf32>
    %78 = arith.divf %76, %77 : vector<8x1xf32>
    %79 = vector.broadcast %78 : vector<8x1xf32> to vector<8x512xf32>
    %80 = arith.subf %74, %79 : vector<8x512xf32>
    %81 = arith.mulf %80, %80 : vector<8x512xf32>
    %cst_15 = arith.constant dense<0.000000e+00> : vector<8xf32>
    %82 = vector.multi_reduction <add>, %81, %cst_15 [1] : vector<8x512xf32> to vector<8xf32>
    %83 = vector.shape_cast %82 : vector<8xf32> to vector<8x1xf32>
    %cst_16 = arith.constant 5.120000e+02 : f32
    %84 = vector.broadcast %cst_16 : f32 to vector<8x1xf32>
    %85 = arith.divf %83, %84 : vector<8x1xf32>
    %cst_17 = arith.constant 9.99999974E-6 : f32
    %86 = vector.broadcast %cst_17 : f32 to vector<8x1xf32>
    %87 = arith.addf %85, %86 : vector<8x1xf32>
    %88 = math.rsqrt %87 : vector<8x1xf32>
    %89 = vector.broadcast %88 : vector<8x1xf32> to vector<8x512xf32>
    %90 = arith.mulf %80, %89 : vector<8x512xf32>
    %cst_18 = arith.constant 0.000000e+00 : f32
    %91 = vector.broadcast %cst_18 : f32 to vector<8x512xf32>
    %92 = arith.cmpf oge, %90, %91 : vector<8x512xf32>
    %cst_19 = arith.constant 3.000000e-01 : f32
    %93 = vector.broadcast %cst_19 : f32 to vector<8x512xf32>
    %94 = arith.mulf %93, %90 : vector<8x512xf32>
    %95 = arith.select %92, %90, %94 : vector<8x512xi1>, vector<8x512xf32>
    %96 = vector.extract_strided_slice %73 {offsets = [8, 0], sizes = [4, 512], strides = [1, 1]} : vector<12x512xf32> to vector<4x512xf32>
    %c0_20 = arith.constant 0 : index
    %c0_21 = arith.constant 0 : index
    %97 = vector.load %arg3[%c0_20, %c0_21] : memref<4x4xf32, #tpu.memory_space<vmem>>, vector<4x4xf32>
    %cst_22 = arith.constant dense<0.000000e+00> : vector<4x512xf32>
    %98 = tpu.matmul %97, %26, %cst_22 {dimension_numbers = #tpu.dot_dimension_numbers<[1], [0], [0], [1], [0, 0, 1, 1], [], []>} : vector<4x4xf32>, vector<4x512xf32>, vector<4x512xf32> -> vector<4x512xf32>
    %99 = arith.addf %98, %96 : vector<4x512xf32>
    %c0_23 = arith.constant 0 : index
    %c0_24 = arith.constant 0 : index
    %100 = vector.load %arg4[%c0_23, %c0_24] : memref<4x8xf32, #tpu.memory_space<vmem>>, vector<4x8xf32>
    %cst_25 = arith.constant dense<0.000000e+00> : vector<4x512xf32>
    %101 = tpu.matmul %100, %95, %cst_25 {dimension_numbers = #tpu.dot_dimension_numbers<[1], [0], [0], [1], [0, 0, 1, 1], [], []>} : vector<4x8xf32>, vector<8x512xf32>, vector<4x512xf32> -> vector<4x512xf32>
    %102 = arith.addf %99, %101 : vector<4x512xf32>
    %cst_26 = arith.constant dense<0.000000e+00> : vector<4xf32>
    %103 = vector.multi_reduction <add>, %102, %cst_26 [1] : vector<4x512xf32> to vector<4xf32>
    %104 = vector.shape_cast %103 : vector<4xf32> to vector<4x1xf32>
    %cst_27 = arith.constant 5.120000e+02 : f32
    %105 = vector.broadcast %cst_27 : f32 to vector<4x1xf32>
    %106 = arith.divf %104, %105 : vector<4x1xf32>
    %107 = vector.broadcast %106 : vector<4x1xf32> to vector<4x512xf32>
    %108 = arith.subf %102, %107 : vector<4x512xf32>
    %109 = arith.mulf %108, %108 : vector<4x512xf32>
    %cst_28 = arith.constant dense<0.000000e+00> : vector<4xf32>
    %110 = vector.multi_reduction <add>, %109, %cst_28 [1] : vector<4x512xf32> to vector<4xf32>
    %111 = vector.shape_cast %110 : vector<4xf32> to vector<4x1xf32>
    %cst_29 = arith.constant 5.120000e+02 : f32
    %112 = vector.broadcast %cst_29 : f32 to vector<4x1xf32>
    %113 = arith.divf %111, %112 : vector<4x1xf32>
    %cst_30 = arith.constant 9.99999974E-6 : f32
    %114 = vector.broadcast %cst_30 : f32 to vector<4x1xf32>
    %115 = arith.addf %113, %114 : vector<4x1xf32>
    %116 = math.rsqrt %115 : vector<4x1xf32>
    %117 = vector.broadcast %116 : vector<4x1xf32> to vector<4x512xf32>
    %118 = arith.mulf %108, %117 : vector<4x512xf32>
    %cst_31 = arith.constant 0.000000e+00 : f32
    %119 = vector.broadcast %cst_31 : f32 to vector<4x512xf32>
    %120 = arith.cmpf oge, %118, %119 : vector<4x512xf32>
    %cst_32 = arith.constant 3.000000e-01 : f32
    %121 = vector.broadcast %cst_32 : f32 to vector<4x512xf32>
    %122 = arith.mulf %121, %118 : vector<4x512xf32>
    %123 = arith.select %120, %118, %122 : vector<4x512xi1>, vector<4x512xf32>
    %c0_33 = arith.constant 0 : index
    %c0_34 = arith.constant 0 : index
    %c0_35 = arith.constant 0 : index
    %124 = vector.load %arg5[%c0_33, %c0_34, %c0_35] : memref<1x4x512xf32, #tpu.memory_space<vmem>>, vector<1x4x512xf32>
    %125 = vector.shape_cast %124 : vector<1x4x512xf32> to vector<4x512xf32>
    %126 = vector.shape_cast %123 : vector<4x512xf32> to vector<1x4x512xf32>
    tpu.vector_store %arg5[%c0_33, %c0_34, %c0_35], %126 {strides = array<i32>} : memref<1x4x512xf32, #tpu.memory_space<vmem>>, vector<1x4x512xf32>,
    return
  }
  func.func @transform_0(%arg0: i32) -> (i32, i32, i32, i32) {
    %c0_i32 = arith.constant 0 : i32
    %c0_i32_0 = arith.constant 0 : i32
    %c0_i32_1 = arith.constant 0 : i32
    %c0_i32_2 = arith.constant 0 : i32
    return %arg0, %c0_i32, %c0_i32_0, %c0_i32_1 : i32, i32, i32, i32
  }
  func.func @transform_1(%arg0: i32) -> (i32, i32, i32) {
    %c0_i32 = arith.constant 0 : i32
    %c0_i32_0 = arith.constant 0 : i32
    %c0_i32_1 = arith.constant 0 : i32
    %c0_i32_2 = arith.constant 0 : i32
    return %c0_i32, %c0_i32_0, %c0_i32_1 : i32, i32, i32
  }
  func.func @transform_2(%arg0: i32) -> (i32, i32) {
    %c0_i32 = arith.constant 0 : i32
    %c0_i32_0 = arith.constant 0 : i32
    %c0_i32_1 = arith.constant 0 : i32
    return %c0_i32, %c0_i32_0 : i32, i32
  }
  func.func @transform_3(%arg0: i32) -> (i32, i32) {
    %c0_i32 = arith.constant 0 : i32
    %c0_i32_0 = arith.constant 0 : i32
    %c0_i32_1 = arith.constant 0 : i32
    return %c0_i32, %c0_i32_0 : i32, i32
  }
  func.func @transform_4(%arg0: i32) -> (i32, i32, i32) {
    %c0_i32 = arith.constant 0 : i32
    %c0_i32_0 = arith.constant 0 : i32
    %c0_i32_1 = arith.constant 0 : i32
    return %arg0, %c0_i32, %c0_i32_0 : i32, i32, i32
  }
}

</mosaic_0001>

<llo_original>
// kernel: tpu_custom_call.1
$region0: #{tpu_custom_call.1}
  #allocation0 [shape = 'u32[]', space=smem, size = 0x4, offset = 0x4, fixed_abs, tag = 'smem constant byte address 0x4 - core index']
  #allocation1 [shape = 'u32[144,128]{1,0:T(1,128)}', space=vmem, size = 0x12000, scoped, tag = 'internal scratch']
  %s0 = inlined_call_operand.hbm [shape: bf16[2,8,4,512], index: 0, kind: input, shape index: {}]
  %s1 = inlined_call_operand.vmem [shape: bf16[8,12,4], index: 1, kind: input, shape index: {}]
  %s2 = inlined_call_operand.vmem [shape: f32[4,4], index: 2, kind: input, shape index: {}]
  %s3 = inlined_call_operand.vmem [shape: f32[4,8], index: 3, kind: input, shape index: {}]
  %s4 = inlined_call_operand.hbm [shape: f32[2,4,512], index: 4, kind: output, shape index: {}]
  %s5 = sld [smem:[#allocation0]]
  $region53: #{tpu_custom_call.1} parent=0
    _
  %s7 = ssub.s32 1, %s5
  %s8 = scalar_select 0, %s7, %s5
  $region1: #{tpu_custom_call.1} parent=0
    #allocation2 [shape = 'u8[65536]{0}', space=vmem, size = 0x10000, scoped, tag = 'input window, operand 0']
    #allocation3 [shape = 's32[2]{0}', space=sflag, size = 0x8, scoped, tag = 'scoped memory for tpu_custom_call.1']
    #allocation4 [shape = 's32[2]{0}', space=sflag, size = 0x8, scoped, tag = 'scoped memory for tpu_custom_call.1']
    #allocation5 [shape = 'u8[16384]{0}', space=vmem, size = 0x4000, scoped, tag = 'output window, operand 0']
    %9 = vsyncpa [#allocation3], 0
    %s10 = scalar_lea.sflag [#allocation3], 1
    %11 = vsyncpa %s10, 0
    %12 = vsyncpa [#allocation4], 0
    %s13 = scalar_lea.sflag [#allocation4], 1
    %14 = vsyncpa %s13, 0
    loop: start=0, step=1, limit=4
    $region2: #{tpu_custom_call.1} parent=1 // loop_pre_header
      _
    $region3: #{tpu_custom_call.1} parent=1 // loop_header
      %s16 = sphi 0, %s20
      %p17 = scmp.ge.s32.totalorder %s16, 4
      %s26 = sphi 0, %s28
      %s29 = sphi 0, %s26
      %s30 = sphi 0, %s29
      %s46 = sphi 0, %s30
      %s50 = sphi 0, %s50
      %s52 = sphi 0, %s50
      %s53 = sphi 0, %s52
      %s67 = sphi 0, %s53
      %s71 = sphi 0, %s71
      %s73 = sphi 0, %s71
      %s74 = sphi 0, %s73
      %s88 = sphi 0, %s74
      %s92 = sphi 0, %s92
      %s94 = sphi 0, %s92
      %s95 = sphi 0, %s94
      %s109 = sphi 0, %s95
      %s115 = sphi 0, %s117
      %s118 = sphi 0, %s115
      %s119 = sphi 0, %s118
      %s135 = sphi 0, %s119
    $region4: #{tpu_custom_call.1} parent=1 // loop_header_branch
      %19 = sbr.rel (%p17) target = $region8
    $region5: #{tpu_custom_call.1} parent=1 // loop_body
      %s21 = ssub.s32 %s16, 1
      %s22 = ssub.s32 %s16, 2
      %s23 = sadd.s32 %s16, 1
      %s24 = ssub.s32 %s16, %s23
      %p25 = scmp.eq.s32.totalorder %s24, 0
      %s27 = sadd.s32 %s26, 1
      %s28 = scalar_select %p25, %s26, %s27
      %p31 = pneg %p25
      %p32 = scmp.eq.s32.totalorder %s16, 1
      %p33 = por %p31, %p32
      %p34 = scmp.ne.s32.totalorder %s26, %s29
      %p35 = scmp.eq.s32.totalorder %s16, 0
      %p36 = por %p34, %p35
      %p37 = scmp.ne.s32.totalorder %s26, %s29
      %p38 = scmp.eq.s32.totalorder %s21, 1
      %p39 = por %p37, %p38
      %p40 = scmp.ne.s32.totalorder %s29, %s30
      %p41 = scmp.eq.s32.totalorder %s21, 0
      %p42 = por %p40, %p41
      %p43 = scmp.ne.s32.totalorder %s29, %s30
      %p44 = scmp.eq.s32.totalorder %s22, 1
      %p45 = por %p43, %p44
      %p47 = scmp.ne.s32.totalorder %s30, %s46
      %p48 = scmp.eq.s32.totalorder %s22, 0
      %p49 = por %p47, %p48
      %s51 = sadd.s32 %s50, 1
      %p54 = scmp.eq.s32.totalorder %s16, 1
      %p55 = scmp.ne.s32.totalorder %s50, %s52
      %p56 = scmp.eq.s32.totalorder %s16, 0
      %p57 = por %p55, %p56
      %p58 = scmp.ne.s32.totalorder %s50, %s52
      %p59 = scmp.eq.s32.totalorder %s21, 1
      %p60 = por %p58, %p59
      %p61 = scmp.ne.s32.totalorder %s52, %s53
      %p62 = scmp.eq.s32.totalorder %s21, 0
      %p63 = por %p61, %p62
      %p64 = scmp.ne.s32.totalorder %s52, %s53
      %p65 = scmp.eq.s32.totalorder %s22, 1
      %p66 = por %p64, %p65
      %p68 = scmp.ne.s32.totalorder %s53, %s67
      %p69 = scmp.eq.s32.totalorder %s22, 0
      %p70 = por %p68, %p69
      %s72 = sadd.s32 %s71, 1
      %p75 = scmp.eq.s32.totalorder %s16, 1
      %p76 = scmp.ne.s32.totalorder %s71, %s73
      %p77 = scmp.eq.s32.totalorder %s16, 0
      %p78 = por %p76, %p77
      %p79 = scmp.ne.s32.totalorder %s71, %s73
      %p80 = scmp.eq.s32.totalorder %s21, 1
      %p81 = por %p79, %p80
      %p82 = scmp.ne.s32.totalorder %s73, %s74
      %p83 = scmp.eq.s32.totalorder %s21, 0
      %p84 = por %p82, %p83
      %p85 = scmp.ne.s32.totalorder %s73, %s74
      %p86 = scmp.eq.s32.totalorder %s22, 1
      %p87 = por %p85, %p86
      %p89 = scmp.ne.s32.totalorder %s74, %s88
      %p90 = scmp.eq.s32.totalorder %s22, 0
      %p91 = por %p89, %p90
      %s93 = sadd.s32 %s92, 1
      %p96 = scmp.eq.s32.totalorder %s16, 1
      %p97 = scmp.ne.s32.totalorder %s92, %s94
      %p98 = scmp.eq.s32.totalorder %s16, 0
      %p99 = por %p97, %p98
      %p100 = scmp.ne.s32.totalorder %s92, %s94
      %p101 = scmp.eq.s32.totalorder %s21, 1
      %p102 = por %p100, %p101
      %p103 = scmp.ne.s32.totalorder %s94, %s95
      %p104 = scmp.eq.s32.totalorder %s21, 0
      %p105 = por %p103, %p104
      %p106 = scmp.ne.s32.totalorder %s94, %s95
      %p107 = scmp.eq.s32.totalorder %s22, 1
      %p108 = por %p106, %p107
      %p110 = scmp.ne.s32.totalorder %s95, %s109
      %p111 = scmp.eq.s32.totalorder %s22, 0
      %p112 = por %p110, %p111
      %s113 = ssub.s32 %s16, %s23
      %p114 = scmp.eq.s32.totalorder %s113, 0
      %s116 = sadd.s32 %s115, 1
      %s117 = scalar_select %p114, %s115, %s116
      %p120 = pneg %p114
      %p121 = scmp.eq.s32.totalorder %s16, 1
      %p122 = por %p120, %p121
      %p123 = scmp.ne.s32.totalorder %s115, %s118
      %p124 = scmp.eq.s32.totalorder %s16, 0
      %p125 = por %p123, %p124
      %p126 = scmp.ne.s32.totalorder %s115, %s118
      %p127 = scmp.eq.s32.totalorder %s21, 1
      %p128 = por %p126, %p127
      %p129 = scmp.ne.s32.totalorder %s118, %s119
      %p130 = scmp.eq.s32.totalorder %s21, 0
      %p131 = por %p129, %p130
      %p132 = scmp.ne.s32.totalorder %s118, %s119
      %p133 = scmp.eq.s32.totalorder %s22, 1
      %p134 = por %p132, %p133
      %p136 = scmp.ne.s32.totalorder %s119, %s135
      %p137 = scmp.eq.s32.totalorder %s22, 0
      %p138 = por %p136, %p137
      %p139 = scmp.le.s32.totalorder 1, %s16
      %p140 = scmp.lt.s32.totalorder %s16, 3
      %p141 = pnand %p139, %p140
      %p142 = pneg %p141
      // Predicated region
      $region9: #{tpu_custom_call.1} parent=5 // pred_check
        _
      $region10: #{tpu_custom_call.1} parent=5 // pred_check_branch
        %144 = sbr.rel (%p141) target = $region12
      $region11: #{tpu_custom_call.1} parent=5 // pred_region
        %s145 = ssub.s32 %s16, 1
        // Predicated region
        $region13: #{tpu_custom_call.1} parent=11 // pred_check
          %p146 = pneg %p63
        $region14: #{tpu_custom_call.1} parent=11 // pred_check_branch
          %148 = sbr.rel (%p146) target = $region16
        $region15: #{tpu_custom_call.1} parent=11 // pred_region
          _
        $region16: #{tpu_custom_call.1} parent=11 // pred_fallthru
          _
        // Predicated region
        $region17: #{tpu_custom_call.1} parent=11 // pred_check
          %p149 = pneg %p84
        $region18: #{tpu_custom_call.1} parent=11 // pred_check_branch
          %151 = sbr.rel (%p149) target = $region20
        $region19: #{tpu_custom_call.1} parent=11 // pred_region
          _
        $region20: #{tpu_custom_call.1} parent=11 // pred_fallthru
          _
        // Predicated region
        $region21: #{tpu_custom_call.1} parent=11 // pred_check
          %p152 = pneg %p105
        $region22: #{tpu_custom_call.1} parent=11 // pred_check_branch
          %154 = sbr.rel (%p152) target = $region24
        $region23: #{tpu_custom_call.1} parent=11 // pred_region
          _
        $region24: #{tpu_custom_call.1} parent=11 // pred_fallthru
          _
      $region12: #{tpu_custom_call.1} parent=5 // pred_fallthru
        _
      %p155 = scmp.lt.s32.totalorder %s16, 2
      // Predicated region
      $region25: #{tpu_custom_call.1} parent=5 // pred_check
        %p156 = pneg %p155
      $region26: #{tpu_custom_call.1} parent=5 // pred_check_branch
        %158 = sbr.rel (%p156) target = $region28
      $region27: #{tpu_custom_call.1} parent=5 // pred_region
        // Predicated region
        $region29: #{tpu_custom_call.1} parent=27 // pred_check
          %p159 = pneg %p36
        $region30: #{tpu_custom_call.1} parent=27 // pred_check_branch
          %161 = sbr.rel (%p159) target = $region32
        $region31: #{tpu_custom_call.1} parent=27 // pred_region
          %s162 = sand.u32 %s26, 1
          %s163 = scalar_lea.sflag [#allocation3], %s162
          %s164 = sand.u32 %s26, 1
          %s165 = smul.addr %s164, 64
          %s166 = scalar_lea.vmem [#allocation2], %s165
          %s168 = ssub.s32 1024, 1024
          %169 = vsyncadd %s163, %s168
          %s170 = smul.addr %s16, 32
          %s171 = smul.addr %s170, 32
          %s172 = scalar_lea.hbm %s0, %s171
          %s173 = sshll.u32 %s166, 4
          %s174 = int_to_ptr.vmem [resolvable:$true] %s173
          %179 = dma.hbm_to_vmem [thread:$0]  %s172, 1024, %s174, %s163, 128, 128, 8
        $region32: #{tpu_custom_call.1} parent=27 // pred_fallthru
          _
      $region28: #{tpu_custom_call.1} parent=5 // pred_fallthru
        _
      %p180 = scmp.le.s32.totalorder 1, %s16
      %p181 = scmp.lt.s32.totalorder %s16, 3
      %p182 = pnand %p180, %p181
      %p183 = pneg %p182
      // Predicated region
      $region33: #{tpu_custom_call.1} parent=5 // pred_check
        _
      $region34: #{tpu_custom_call.1} parent=5 // pred_check_branch
        %185 = sbr.rel (%p182) target = $region36
      $region35: #{tpu_custom_call.1} parent=5 // pred_region
        %s186 = ssub.s32 %s16, 1
        %s187 = sand.u32 %s29, 1
        %s188 = scalar_lea.sflag [#allocation3], %s187
        %s189 = sand.u32 %s29, 1
        %s190 = smul.addr %s189, 64
        %s191 = scalar_lea.vmem [#allocation2], %s190
        // Predicated region
        $region37: #{tpu_custom_call.1} parent=35 // pred_check
          %p192 = pneg %p42
        $region38: #{tpu_custom_call.1} parent=35 // pred_check_branch
          %194 = sbr.rel (%p192) target = $region40
        $region39: #{tpu_custom_call.1} parent=35 // pred_region
          %195 = dma.done %s188, 1024
        $region40: #{tpu_custom_call.1} parent=35 // pred_fallthru
          _
        %s196 = sand.u32 %s29, 1
        %s197 = scalar_lea.sflag [#allocation3], %s196
        %s198 = sand.u32 %s29, 1
        %s199 = smul.addr %s198, 64
        %s200 = scalar_lea.vmem [#allocation2], %s199
        %p201 = pneg %p42
        %p202 = pneg %p39
        %p203 = pneg %p63
        %p204 = pneg %p60
        %p205 = pneg %p84
        %p206 = pneg %p81
        %p207 = pneg %p105
        %p208 = pneg %p102
        %p209 = pneg %p131
        %p210 = pneg %p128
        %s211 = sand.u32 %s118, 1
        %s212 = scalar_lea.sflag [#allocation4], %s211
        %s213 = sand.u32 %s118, 1
        %s214 = smul.addr %s213, 16
        %s215 = scalar_lea.vmem [#allocation5], %s214
        %v217 = vld [vmem:[%s191] sm:$0xff]
        %v218 = vld [vmem:[%s191 + $0x8] sm:$0xff]
        %v219 = vld [vmem:[%s191 + $0x10] sm:$0xff]
        %v220 = vld [vmem:[%s191 + $0x18] sm:$0xff]
        %v221 = vld [vmem:[%s191 + $0x20] sm:$0xff]
        %v222 = vld [vmem:[%s191 + $0x28] sm:$0xff]
        %v223 = vld [vmem:[%s191 + $0x30] sm:$0xff]
        %v224 = vld [vmem:[%s191 + $0x38] sm:$0xff]
        %v225 = vld [vmem:[%s1] sm:$0xf]
        %v226 = vld [vmem:[%s1 + $0x4] sm:$0x3]
        %v227 = vld [vmem:[%s1 + $0x8] sm:$0xf]
        %v228 = vld [vmem:[%s1 + $0xc] sm:$0x3]
        %v229 = vld [vmem:[%s1 + $0x10] sm:$0xf]
        %v230 = vld [vmem:[%s1 + $0x14] sm:$0x3]
        %v231 = vld [vmem:[%s1 + $0x18] sm:$0xf]
        %v232 = vld [vmem:[%s1 + $0x1c] sm:$0x3]
        %v233 = vld [vmem:[%s1 + $0x20] sm:$0xf]
        %v234 = vld [vmem:[%s1 + $0x24] sm:$0x3]
        %v235 = vld [vmem:[%s1 + $0x28] sm:$0xf]
        %v236 = vld [vmem:[%s1 + $0x2c] sm:$0x3]
        %v237 = vld [vmem:[%s1 + $0x30] sm:$0xf]
        %v238 = vld [vmem:[%s1 + $0x34] sm:$0x3]
        %v239 = vld [vmem:[%s1 + $0x38] sm:$0xf]
        %v240 = vld [vmem:[%s1 + $0x3c] sm:$0x3]
        %v241 = vmax.bf16 %v217, %v218
        %v242 = vmax.bf16 %v241, %v219
        %v243 = vmax.bf16 %v242, %v220
        %v244 = vmax.bf16 %v243, %v221
        %v245 = vmax.bf16 %v244, %v222
        %v246 = vmax.bf16 %v245, %v223
        %v247 = vmax.bf16 %v246, %v224
        %v248 = vunpack.c.l.bf16 %v247
        %v249 = vunpack.c.h.bf16 %v247
        %v252 = vunpack.c.l.b16 %v227
        %v253 = vunpack.c.l.b16 %v228
        %v254 = vpack.c.b16 %v253, %v252
        %v256 = vcombine.high %v218, %v218
        %v258 = vunpack.c.l.s4 1983009808
        %v259 = vunpack.c.0.s8 %v258
        %v260 = vlaneseq
        %v261 = vshrl.u32 %v260, 7
        %v262 = vsub.s32 %v259, %v261
        %v263 = vrot.slane %v218, %v262
        %v265 = vunpack.c.l.s4 1983009808
        %v266 = vunpack.c.0.s8 %v265
        %v267 = vlaneseq
        %v268 = vshrl.u32 %v267, 7
        %v269 = vsub.s32 %v266, %v268
        %v270 = vrot.slane %v256, %v269
        %v271 = vcombine.high %v263, %v263
        %v272 = vcombine.high %v270, %v270
        %vm273 = vcmask 31744
        %v275 = vsel %vm273, %v254, 0
        %vm277 = vcmask 1041408
        %v279 = vsel %vm277, %v263, 0
        %v282 = vsel %vm277, %v271, 0
        %v285 = vsel %vm277, %v270, 0
        %v288 = vsel %vm277, %v272, 0
        %290 = vmatprep.subr.bf16.mxu0 0
        %291 = vmatpush1.bf16.msra.mxu0 0
        %292 = vmatprep.subr.bf16.mxu0 0
        %293 = vmatpush1.bf16.msra.mxu0 0
        %294 = vmatprep.subr.bf16.mxu0 0
        %295 = vmatpush1.bf16.msra.mxu0 0
        %296 = vmatprep.subr.bf16.mxu0 0
        %297 = vmatpush1.bf16.msra.mxu0 0
        %298 = vmatprep.subr.bf16.mxu0 0
        %299 = vmatpush1.bf16.msra.mxu0 0
        %300 = vmatprep.subr.bf16.mxu0 0
        %301 = vmatpush1.bf16.msra.mxu0 0
        %302 = vmatprep.subr.bf16.mxu0 0
        %303 = vmatpush1.bf16.msra.mxu0 0
        %304 = vmatprep.subr.bf16.mxu0 %v282
        %305 = vmatpush1.bf16.msra.mxu0 %v279
        %306 = vmatprep.subr.bf16.mxu0 0
        %307 = vmatpush2.bf16.msra.mxu0 0
        %308 = vmatprep.subr.bf16.mxu0 0
        %309 = vmatpush2.bf16.msra.mxu0 0
        %310 = vmatprep.subr.bf16.mxu0 0
        %311 = vmatpush2.bf16.msra.mxu0 0
        %312 = vmatprep.subr.bf16.mxu0 0
        %313 = vmatpush2.bf16.msra.mxu0 0
        %314 = vmatprep.subr.bf16.mxu0 0
        %315 = vmatpush2.bf16.msra.mxu0 0
        %316 = vmatprep.subr.bf16.mxu0 0
        %317 = vmatpush2.bf16.msra.mxu0 0
        %318 = vmatprep.subr.bf16.mxu0 0
        %319 = vmatpush2.bf16.msra.mxu0 0
        %320 = vmatprep.subr.bf16.mxu0 0
        %321 = vmatpush2.bf16.msra.mxu0 0
        %322 = vmatprep.mubr.bf16.mxu0 0
        %323 = vmatmul.mubr.bf16.gmra.mxu0 %v275
        %v324 = vpop.f32.mrf.mxu0
        %v325 = vadd.f32 0.0, %v324
        %v326 = vpop.f32.mrf.mxu0
        %v327 = vadd.f32 0.0, %v326
        %v328 = vpop.f32.mrf.mxu0
        %v329 = vadd.f32 0.0, %v328
        %v330 = vpop.f32.mrf.mxu0
        %v331 = vadd.f32 0.0, %v330
        %332 = vdwg.mxu0
        %333 = vmatprep.subr.bf16.mxu0 0
        %334 = vmatpush1.bf16.msra.mxu0 0
        %335 = vmatprep.subr.bf16.mxu0 0
        %336 = vmatpush1.bf16.msra.mxu0 0
        %337 = vmatprep.subr.bf16.mxu0 0
        %338 = vmatpush1.bf16.msra.mxu0 0
        %339 = vmatprep.subr.bf16.mxu0 0
        %340 = vmatpush1.bf16.msra.mxu0 0
        %341 = vmatprep.subr.bf16.mxu0 0
        %342 = vmatpush1.bf16.msra.mxu0 0
        %343 = vmatprep.subr.bf16.mxu0 0
        %344 = vmatpush1.bf16.msra.mxu0 0
        %345 = vmatprep.subr.bf16.mxu0 0
        %346 = vmatpush1.bf16.msra.mxu0 0
        %347 = vmatprep.subr.bf16.mxu0 %v288
        %348 = vmatpush1.bf16.msra.mxu0 %v285
        %349 = vmatprep.subr.bf16.mxu0 0
        %350 = vmatpush2.bf16.msra.mxu0 0
        %351 = vmatprep.subr.bf16.mxu0 0
        %352 = vmatpush2.bf16.msra.mxu0 0
        %353 = vmatprep.subr.bf16.mxu0 0
        %354 = vmatpush2.bf16.msra.mxu0 0
        %355 = vmatprep.subr.bf16.mxu0 0
        %356 = vmatpush2.bf16.msra.mxu0 0
        %357 = vmatprep.subr.bf16.mxu0 0
        %358 = vmatpush2.bf16.msra.mxu0 0
        %359 = vmatprep.subr.bf16.mxu0 0
        %360 = vmatpush2.bf16.msra.mxu0 0
        %361 = vmatprep.subr.bf16.mxu0 0
        %362 = vmatpush2.bf16.msra.mxu0 0
        %363 = vmatprep.subr.bf16.mxu0 0
        %364 = vmatpush2.bf16.msra.mxu0 0
        %365 = vmatprep.mubr.bf16.mxu0 0
        %366 = vmatmul.mubr.bf16.gmra.mxu0 %v275
        %v367 = vpop.f32.mrf.mxu0
        %v368 = vadd.f32 0.0, %v367
        %v369 = vpop.f32.mrf.mxu0
        %v370 = vadd.f32 0.0, %v369
        %v371 = vpop.f32.mrf.mxu0
        %v372 = vadd.f32 0.0, %v371
        %v373 = vpop.f32.mrf.mxu0
        %v374 = vadd.f32 0.0, %v373
        %375 = vdwg.mxu0
        %v378 = vunpack.c.l.b16 %v225
        %v379 = vunpack.c.l.b16 %v226
        %v380 = vpack.c.b16 %v379, %v378
        %v382 = vcombine.high %v217, %v217
        %v384 = vunpack.c.l.s4 1983009808
        %v385 = vunpack.c.0.s8 %v384
        %v386 = vlaneseq
        %v387 = vshrl.u32 %v386, 7
        %v388 = vsub.s32 %v385, %v387
        %v389 = vrot.slane %v217, %v388
        %v391 = vunpack.c.l.s4 1983009808
        %v392 = vunpack.c.0.s8 %v391
        %v393 = vlaneseq
        %v394 = vshrl.u32 %v393, 7
        %v395 = vsub.s32 %v392, %v394
        %v396 = vrot.slane %v382, %v395
        %v397 = vcombine.high %v389, %v389
        %v398 = vcombine.high %v396, %v396
        %v400 = vsel %vm273, %v380, 0
        %v403 = vsel %vm277, %v389, 0
        %v406 = vsel %vm277, %v397, 0
        %v409 = vsel %vm277, %v396, 0
        %v412 = vsel %vm277, %v398, 0
        %414 = vmatprep.subr.bf16.mxu0 0
        %415 = vmatpush1.bf16.msra.mxu0 0
        %416 = vmatprep.subr.bf16.mxu0 0
        %417 = vmatpush1.bf16.msra.mxu0 0
        %418 = vmatprep.subr.bf16.mxu0 0
        %419 = vmatpush1.bf16.msra.mxu0 0
        %420 = vmatprep.subr.bf16.mxu0 0
        %421 = vmatpush1.bf16.msra.mxu0 0
        %422 = vmatprep.subr.bf16.mxu0 0
        %423 = vmatpush1.bf16.msra.mxu0 0
        %424 = vmatprep.subr.bf16.mxu0 0
        %425 = vmatpush1.bf16.msra.mxu0 0
        %426 = vmatprep.subr.bf16.mxu0 0
        %427 = vmatpush1.bf16.msra.mxu0 0
        %428 = vmatprep.subr.bf16.mxu0 %v406
        %429 = vmatpush1.bf16.msra.mxu0 %v403
        %430 = vmatprep.subr.bf16.mxu0 0
        %431 = vmatpush2.bf16.msra.mxu0 0
        %432 = vmatprep.subr.bf16.mxu0 0
        %433 = vmatpush2.bf16.msra.mxu0 0
        %434 = vmatprep.subr.bf16.mxu0 0
        %435 = vmatpush2.bf16.msra.mxu0 0
        %436 = vmatprep.subr.bf16.mxu0 0
        %437 = vmatpush2.bf16.msra.mxu0 0
        %438 = vmatprep.subr.bf16.mxu0 0
        %439 = vmatpush2.bf16.msra.mxu0 0
        %440 = vmatprep.subr.bf16.mxu0 0
        %441 = vmatpush2.bf16.msra.mxu0 0
        %442 = vmatprep.subr.bf16.mxu0 0
        %443 = vmatpush2.bf16.msra.mxu0 0
        %444 = vmatprep.subr.bf16.mxu0 0
        %445 = vmatpush2.bf16.msra.mxu0 0
        %446 = vmatprep.mubr.bf16.mxu0 0
        %447 = vmatmul.mubr.bf16.gmra.mxu0 %v400
        %v448 = vpop.f32.mrf.mxu0
        %v449 = vadd.f32 %v325, %v448
        %v450 = vpop.f32.mrf.mxu0
        %v451 = vadd.f32 %v327, %v450
        %v452 = vpop.f32.mrf.mxu0
        %v453 = vadd.f32 %v329, %v452
        %v454 = vpop.f32.mrf.mxu0
        %v455 = vadd.f32 %v331, %v454
        %456 = vdwg.mxu0
        %457 = vmatprep.subr.bf16.mxu0 0
        %458 = vmatpush1.bf16.msra.mxu0 0
        %459 = vmatprep.subr.bf16.mxu0 0
        %460 = vmatpush1.bf16.msra.mxu0 0
        %461 = vmatprep.subr.bf16.mxu0 0
        %462 = vmatpush1.bf16.msra.mxu0 0
        %463 = vmatprep.subr.bf16.mxu0 0
        %464 = vmatpush1.bf16.msra.mxu0 0
        %465 = vmatprep.subr.bf16.mxu0 0
        %466 = vmatpush1.bf16.msra.mxu0 0
        %467 = vmatprep.subr.bf16.mxu0 0
        %468 = vmatpush1.bf16.msra.mxu0 0
        %469 = vmatprep.subr.bf16.mxu0 0
        %470 = vmatpush1.bf16.msra.mxu0 0
        %471 = vmatprep.subr.bf16.mxu0 %v412
        %472 = vmatpush1.bf16.msra.mxu0 %v409
        %473 = vmatprep.subr.bf16.mxu0 0
        %474 = vmatpush2.bf16.msra.mxu0 0
        %475 = vmatprep.subr.bf16.mxu0 0
        %476 = vmatpush2.bf16.msra.mxu0 0
        %477 = vmatprep.subr.bf16.mxu0 0
        %478 = vmatpush2.bf16.msra.mxu0 0
        %479 = vmatprep.subr.bf16.mxu0 0
        %480 = vmatpush2.bf16.msra.mxu0 0
        %481 = vmatprep.subr.bf16.mxu0 0
        %482 = vmatpush2.bf16.msra.mxu0 0
        %483 = vmatprep.subr.bf16.mxu0 0
        %484 = vmatpush2.bf16.msra.mxu0 0
        %485 = vmatprep.subr.bf16.mxu0 0
        %486 = vmatpush2.bf16.msra.mxu0 0
        %487 = vmatprep.subr.bf16.mxu0 0
        %488 = vmatpush2.bf16.msra.mxu0 0
        %489 = vmatprep.mubr.bf16.mxu0 0
        %490 = vmatmul.mubr.bf16.gmra.mxu0 %v400
        %v491 = vpop.f32.mrf.mxu0
        %v492 = vadd.f32 %v368, %v491
        %v493 = vpop.f32.mrf.mxu0
        %v494 = vadd.f32 %v370, %v493
        %v495 = vpop.f32.mrf.mxu0
        %v496 = vadd.f32 %v372, %v495
        %v497 = vpop.f32.mrf.mxu0
        %v498 = vadd.f32 %v374, %v497
        %499 = vdwg.mxu0
        %v502 = vunpack.c.l.b16 %v229
        %v503 = vunpack.c.l.b16 %v230
        %v504 = vpack.c.b16 %v503, %v502
        %v506 = vcombine.high %v219, %v219
        %v508 = vunpack.c.l.s4 1983009808
        %v509 = vunpack.c.0.s8 %v508
        %v510 = vlaneseq
        %v511 = vshrl.u32 %v510, 7
        %v512 = vsub.s32 %v509, %v511
        %v513 = vrot.slane %v219, %v512
        %v515 = vunpack.c.l.s4 1983009808
        %v516 = vunpack.c.0.s8 %v515
        %v517 = vlaneseq
        %v518 = vshrl.u32 %v517, 7
        %v519 = vsub.s32 %v516, %v518
        %v520 = vrot.slane %v506, %v519
        %v521 = vcombine.high %v513, %v513
        %v522 = vcombine.high %v520, %v520
        %v524 = vsel %vm273, %v504, 0
        %v527 = vsel %vm277, %v513, 0
        %v530 = vsel %vm277, %v521, 0
        %v533 = vsel %vm277, %v520, 0
        %v536 = vsel %vm277, %v522, 0
        %538 = vmatprep.subr.bf16.mxu0 0
        %539 = vmatpush1.bf16.msra.mxu0 0
        %540 = vmatprep.subr.bf16.mxu0 0
        %541 = vmatpush1.bf16.msra.mxu0 0
        %542 = vmatprep.subr.bf16.mxu0 0
        %543 = vmatpush1.bf16.msra.mxu0 0
        %544 = vmatprep.subr.bf16.mxu0 0
        %545 = vmatpush1.bf16.msra.mxu0 0
        %546 = vmatprep.subr.bf16.mxu0 0
        %547 = vmatpush1.bf16.msra.mxu0 0
        %548 = vmatprep.subr.bf16.mxu0 0
        %549 = vmatpush1.bf16.msra.mxu0 0
        %550 = vmatprep.subr.bf16.mxu0 0
        %551 = vmatpush1.bf16.msra.mxu0 0
        %552 = vmatprep.subr.bf16.mxu0 %v530
        %553 = vmatpush1.bf16.msra.mxu0 %v527
        %554 = vmatprep.subr.bf16.mxu0 0
        %555 = vmatpush2.bf16.msra.mxu0 0
        %556 = vmatprep.subr.bf16.mxu0 0
        %557 = vmatpush2.bf16.msra.mxu0 0
        %558 = vmatprep.subr.bf16.mxu0 0
        %559 = vmatpush2.bf16.msra.mxu0 0
        %560 = vmatprep.subr.bf16.mxu0 0
        %561 = vmatpush2.bf16.msra.mxu0 0
        %562 = vmatprep.subr.bf16.mxu0 0
        %563 = vmatpush2.bf16.msra.mxu0 0
        %564 = vmatprep.subr.bf16.mxu0 0
        %565 = vmatpush2.bf16.msra.mxu0 0
        %566 = vmatprep.subr.bf16.mxu0 0
        %567 = vmatpush2.bf16.msra.mxu0 0
        %568 = vmatprep.subr.bf16.mxu0 0
        %569 = vmatpush2.bf16.msra.mxu0 0
        %570 = vmatprep.mubr.bf16.mxu0 0
        %571 = vmatmul.mubr.bf16.gmra.mxu0 %v524
        %v572 = vpop.f32.mrf.mxu0
        %v573 = vadd.f32 0.0, %v572
        %v574 = vpop.f32.mrf.mxu0
        %v575 = vadd.f32 0.0, %v574
        %v576 = vpop.f32.mrf.mxu0
        %v577 = vadd.f32 0.0, %v576
        %v578 = vpop.f32.mrf.mxu0
        %v579 = vadd.f32 0.0, %v578
        %580 = vdwg.mxu0
        %581 = vmatprep.subr.bf16.mxu0 0
        %582 = vmatpush1.bf16.msra.mxu0 0
        %583 = vmatprep.subr.bf16.mxu0 0
        %584 = vmatpush1.bf16.msra.mxu0 0
        %585 = vmatprep.subr.bf16.mxu0 0
        %586 = vmatpush1.bf16.msra.mxu0 0
        %587 = vmatprep.subr.bf16.mxu0 0
        %588 = vmatpush1.bf16.msra.mxu0 0
        %589 = vmatprep.subr.bf16.mxu0 0
        %590 = vmatpush1.bf16.msra.mxu0 0
        %591 = vmatprep.subr.bf16.mxu0 0
        %592 = vmatpush1.bf16.msra.mxu0 0
        %593 = vmatprep.subr.bf16.mxu0 0
        %594 = vmatpush1.bf16.msra.mxu0 0
        %595 = vmatprep.subr.bf16.mxu0 %v536
        %596 = vmatpush1.bf16.msra.mxu0 %v533
        %597 = vmatprep.subr.bf16.mxu0 0
        %598 = vmatpush2.bf16.msra.mxu0 0
        %599 = vmatprep.subr.bf16.mxu0 0
        %600 = vmatpush2.bf16.msra.mxu0 0
        %601 = vmatprep.subr.bf16.mxu0 0
        %602 = vmatpush2.bf16.msra.mxu0 0
        %603 = vmatprep.subr.bf16.mxu0 0
        %604 = vmatpush2.bf16.msra.mxu0 0
        %605 = vmatprep.subr.bf16.mxu0 0
        %606 = vmatpush2.bf16.msra.mxu0 0
        %607 = vmatprep.subr.bf16.mxu0 0
        %608 = vmatpush2.bf16.msra.mxu0 0
        %609 = vmatprep.subr.bf16.mxu0 0
        %610 = vmatpush2.bf16.msra.mxu0 0
        %611 = vmatprep.subr.bf16.mxu0 0
        %612 = vmatpush2.bf16.msra.mxu0 0
        %613 = vmatprep.mubr.bf16.mxu0 0
        %614 = vmatmul.mubr.bf16.gmra.mxu0 %v524
        %v615 = vpop.f32.mrf.mxu0
        %v616 = vadd.f32 0.0, %v615
        %v617 = vpop.f32.mrf.mxu0
        %v618 = vadd.f32 0.0, %v617
        %v619 = vpop.f32.mrf.mxu0
        %v620 = vadd.f32 0.0, %v619
        %v621 = vpop.f32.mrf.mxu0
        %v622 = vadd.f32 0.0, %v621
        %623 = vdwg.mxu0
        %v624 = vadd.f32 %v449, %v573
        %v625 = vadd.f32 %v451, %v575
        %v626 = vadd.f32 %v492, %v616
        %v627 = vadd.f32 %v494, %v618
        %v628 = vadd.f32 %v453, %v577
        %v629 = vadd.f32 %v455, %v579
        %v630 = vadd.f32 %v496, %v620
        %v631 = vadd.f32 %v498, %v622
        %v634 = vunpack.c.l.b16 %v231
        %v635 = vunpack.c.l.b16 %v232
        %v636 = vpack.c.b16 %v635, %v634
        %v638 = vcombine.high %v220, %v220
        %v640 = vunpack.c.l.s4 1983009808
        %v641 = vunpack.c.0.s8 %v640
        %v642 = vlaneseq
        %v643 = vshrl.u32 %v642, 7
        %v644 = vsub.s32 %v641, %v643
        %v645 = vrot.slane %v220, %v644
        %v647 = vunpack.c.l.s4 1983009808
        %v648 = vunpack.c.0.s8 %v647
        %v649 = vlaneseq
        %v650 = vshrl.u32 %v649, 7
        %v651 = vsub.s32 %v648, %v650
        %v652 = vrot.slane %v638, %v651
        %v653 = vcombine.high %v645, %v645
        %v654 = vcombine.high %v652, %v652
        %v656 = vsel %vm273, %v636, 0
        %v659 = vsel %vm277, %v645, 0
        %v662 = vsel %vm277, %v653, 0
        %v665 = vsel %vm277, %v652, 0
        %v668 = vsel %vm277, %v654, 0
        %670 = vmatprep.subr.bf16.mxu0 0
        %671 = vmatpush1.bf16.msra.mxu0 0
        %672 = vmatprep.subr.bf16.mxu0 0
        %673 = vmatpush1.bf16.msra.mxu0 0
        %674 = vmatprep.subr.bf16.mxu0 0
        %675 = vmatpush1.bf16.msra.mxu0 0
        %676 = vmatprep.subr.bf16.mxu0 0
        %677 = vmatpush1.bf16.msra.mxu0 0
        %678 = vmatprep.subr.bf16.mxu0 0
        %679 = vmatpush1.bf16.msra.mxu0 0
        %680 = vmatprep.subr.bf16.mxu0 0
        %681 = vmatpush1.bf16.msra.mxu0 0
        %682 = vmatprep.subr.bf16.mxu0 0
        %683 = vmatpush1.bf16.msra.mxu0 0
        %684 = vmatprep.subr.bf16.mxu0 %v662
        %685 = vmatpush1.bf16.msra.mxu0 %v659
        %686 = vmatprep.subr.bf16.mxu0 0
        %687 = vmatpush2.bf16.msra.mxu0 0
        %688 = vmatprep.subr.bf16.mxu0 0
        %689 = vmatpush2.bf16.msra.mxu0 0
        %690 = vmatprep.subr.bf16.mxu0 0
        %691 = vmatpush2.bf16.msra.mxu0 0
        %692 = vmatprep.subr.bf16.mxu0 0
        %693 = vmatpush2.bf16.msra.mxu0 0
        %694 = vmatprep.subr.bf16.mxu0 0
        %695 = vmatpush2.bf16.msra.mxu0 0
        %696 = vmatprep.subr.bf16.mxu0 0
        %697 = vmatpush2.bf16.msra.mxu0 0
        %698 = vmatprep.subr.bf16.mxu0 0
        %699 = vmatpush2.bf16.msra.mxu0 0
        %700 = vmatprep.subr.bf16.mxu0 0
        %701 = vmatpush2.bf16.msra.mxu0 0
        %702 = vmatprep.mubr.bf16.mxu0 0
        %703 = vmatmul.mubr.bf16.gmra.mxu0 %v656
        %v704 = vpop.f32.mrf.mxu0
        %v705 = vadd.f32 0.0, %v704
        %v706 = vpop.f32.mrf.mxu0
        %v707 = vadd.f32 0.0, %v706
        %v708 = vpop.f32.mrf.mxu0
        %v709 = vadd.f32 0.0, %v708
        %v710 = vpop.f32.mrf.mxu0
        %v711 = vadd.f32 0.0, %v710
        %712 = vdwg.mxu0
        %713 = vmatprep.subr.bf16.mxu0 0
        %714 = vmatpush1.bf16.msra.mxu0 0
        %715 = vmatprep.subr.bf16.mxu0 0
        %716 = vmatpush1.bf16.msra.mxu0 0
        %717 = vmatprep.subr.bf16.mxu0 0
        %718 = vmatpush1.bf16.msra.mxu0 0
        %719 = vmatprep.subr.bf16.mxu0 0
        %720 = vmatpush1.bf16.msra.mxu0 0
        %721 = vmatprep.subr.bf16.mxu0 0
        %722 = vmatpush1.bf16.msra.mxu0 0
        %723 = vmatprep.subr.bf16.mxu0 0
        %724 = vmatpush1.bf16.msra.mxu0 0
        %725 = vmatprep.subr.bf16.mxu0 0
        %726 = vmatpush1.bf16.msra.mxu0 0
        %727 = vmatprep.subr.bf16.mxu0 %v668
        %728 = vmatpush1.bf16.msra.mxu0 %v665
        %729 = vmatprep.subr.bf16.mxu0 0
        %730 = vmatpush2.bf16.msra.mxu0 0
        %731 = vmatprep.subr.bf16.mxu0 0
        %732 = vmatpush2.bf16.msra.mxu0 0
        %733 = vmatprep.subr.bf16.mxu0 0
        %734 = vmatpush2.bf16.msra.mxu0 0
        %735 = vmatprep.subr.bf16.mxu0 0
        %736 = vmatpush2.bf16.msra.mxu0 0
        %737 = vmatprep.subr.bf16.mxu0 0
        %738 = vmatpush2.bf16.msra.mxu0 0
        %739 = vmatprep.subr.bf16.mxu0 0
        %740 = vmatpush2.bf16.msra.mxu0 0
        %741 = vmatprep.subr.bf16.mxu0 0
        %742 = vmatpush2.bf16.msra.mxu0 0
        %743 = vmatprep.subr.bf16.mxu0 0
        %744 = vmatpush2.bf16.msra.mxu0 0
        %745 = vmatprep.mubr.bf16.mxu0 0
        %746 = vmatmul.mubr.bf16.gmra.mxu0 %v656
        %v747 = vpop.f32.mrf.mxu0
        %v748 = vadd.f32 0.0, %v747
        %v749 = vpop.f32.mrf.mxu0
        %v750 = vadd.f32 0.0, %v749
        %v751 = vpop.f32.mrf.mxu0
        %v752 = vadd.f32 0.0, %v751
        %v753 = vpop.f32.mrf.mxu0
        %v754 = vadd.f32 0.0, %v753
        %755 = vdwg.mxu0
        %v756 = vadd.f32 %v624, %v705
        %v757 = vadd.f32 %v625, %v707
        %v758 = vadd.f32 %v626, %v748
        %v759 = vadd.f32 %v627, %v750
        %v760 = vadd.f32 %v628, %v709
        %v761 = vadd.f32 %v629, %v711
        %v762 = vadd.f32 %v630, %v752
        %v763 = vadd.f32 %v631, %v754
        %v766 = vunpack.c.l.b16 %v233
        %v767 = vunpack.c.l.b16 %v234
        %v768 = vpack.c.b16 %v767, %v766
        %v770 = vcombine.high %v221, %v221
        %v772 = vunpack.c.l.s4 1983009808
        %v773 = vunpack.c.0.s8 %v772
        %v774 = vlaneseq
        %v775 = vshrl.u32 %v774, 7
        %v776 = vsub.s32 %v773, %v775
        %v777 = vrot.slane %v221, %v776
        %v779 = vunpack.c.l.s4 1983009808
        %v780 = vunpack.c.0.s8 %v779
        %v781 = vlaneseq
        %v782 = vshrl.u32 %v781, 7
        %v783 = vsub.s32 %v780, %v782
        %v784 = vrot.slane %v770, %v783
        %v785 = vcombine.high %v777, %v777
        %v786 = vcombine.high %v784, %v784
        %v788 = vsel %vm273, %v768, 0
        %v791 = vsel %vm277, %v777, 0
        %v794 = vsel %vm277, %v785, 0
        %v797 = vsel %vm277, %v784, 0
        %v800 = vsel %vm277, %v786, 0
        %802 = vmatprep.subr.bf16.mxu0 0
        %803 = vmatpush1.bf16.msra.mxu0 0
        %804 = vmatprep.subr.bf16.mxu0 0
        %805 = vmatpush1.bf16.msra.mxu0 0
        %806 = vmatprep.subr.bf16.mxu0 0
        %807 = vmatpush1.bf16.msra.mxu0 0
        %808 = vmatprep.subr.bf16.mxu0 0
        %809 = vmatpush1.bf16.msra.mxu0 0
        %810 = vmatprep.subr.bf16.mxu0 0
        %811 = vmatpush1.bf16.msra.mxu0 0
        %812 = vmatprep.subr.bf16.mxu0 0
        %813 = vmatpush1.bf16.msra.mxu0 0
        %814 = vmatprep.subr.bf16.mxu0 0
        %815 = vmatpush1.bf16.msra.mxu0 0
        %816 = vmatprep.subr.bf16.mxu0 %v794
        %817 = vmatpush1.bf16.msra.mxu0 %v791
        %818 = vmatprep.subr.bf16.mxu0 0
        %819 = vmatpush2.bf16.msra.mxu0 0
        %820 = vmatprep.subr.bf16.mxu0 0
        %821 = vmatpush2.bf16.msra.mxu0 0
        %822 = vmatprep.subr.bf16.mxu0 0
        %823 = vmatpush2.bf16.msra.mxu0 0
        %824 = vmatprep.subr.bf16.mxu0 0
        %825 = vmatpush2.bf16.msra.mxu0 0
        %826 = vmatprep.subr.bf16.mxu0 0
        %827 = vmatpush2.bf16.msra.mxu0 0
        %828 = vmatprep.subr.bf16.mxu0 0
        %829 = vmatpush2.bf16.msra.mxu0 0
        %830 = vmatprep.subr.bf16.mxu0 0
        %831 = vmatpush2.bf16.msra.mxu0 0
        %832 = vmatprep.subr.bf16.mxu0 0
        %833 = vmatpush2.bf16.msra.mxu0 0
        %834 = vmatprep.mubr.bf16.mxu0 0
        %835 = vmatmul.mubr.bf16.gmra.mxu0 %v788
        %v836 = vpop.f32.mrf.mxu0
        %v837 = vadd.f32 0.0, %v836
        %v838 = vpop.f32.mrf.mxu0
        %v839 = vadd.f32 0.0, %v838
        %v840 = vpop.f32.mrf.mxu0
        %v841 = vadd.f32 0.0, %v840
        %v842 = vpop.f32.mrf.mxu0
        %v843 = vadd.f32 0.0, %v842
        %844 = vdwg.mxu0
        %845 = vmatprep.subr.bf16.mxu0 0
        %846 = vmatpush1.bf16.msra.mxu0 0
        %847 = vmatprep.subr.bf16.mxu0 0
        %848 = vmatpush1.bf16.msra.mxu0 0
        %849 = vmatprep.subr.bf16.mxu0 0
        %850 = vmatpush1.bf16.msra.mxu0 0
        %851 = vmatprep.subr.bf16.mxu0 0
        %852 = vmatpush1.bf16.msra.mxu0 0
        %853 = vmatprep.subr.bf16.mxu0 0
        %854 = vmatpush1.bf16.msra.mxu0 0
        %855 = vmatprep.subr.bf16.mxu0 0
        %856 = vmatpush1.bf16.msra.mxu0 0
        %857 = vmatprep.subr.bf16.mxu0 0
        %858 = vmatpush1.bf16.msra.mxu0 0
        %859 = vmatprep.subr.bf16.mxu0 %v800
        %860 = vmatpush1.bf16.msra.mxu0 %v797
        %861 = vmatprep.subr.bf16.mxu0 0
        %862 = vmatpush2.bf16.msra.mxu0 0
        %863 = vmatprep.subr.bf16.mxu0 0
        %864 = vmatpush2.bf16.msra.mxu0 0
        %865 = vmatprep.subr.bf16.mxu0 0
        %866 = vmatpush2.bf16.msra.mxu0 0
        %867 = vmatprep.subr.bf16.mxu0 0
        %868 = vmatpush2.bf16.msra.mxu0 0
        %869 = vmatprep.subr.bf16.mxu0 0
        %870 = vmatpush2.bf16.msra.mxu0 0
        %871 = vmatprep.subr.bf16.mxu0 0
        %872 = vmatpush2.bf16.msra.mxu0 0
        %873 = vmatprep.subr.bf16.mxu0 0
        %874 = vmatpush2.bf16.msra.mxu0 0
        %875 = vmatprep.subr.bf16.mxu0 0
        %876 = vmatpush2.bf16.msra.mxu0 0
        %877 = vmatprep.mubr.bf16.mxu0 0
        %878 = vmatmul.mubr.bf16.gmra.mxu0 %v788
        %v879 = vpop.f32.mrf.mxu0
        %v880 = vadd.f32 0.0, %v879
        %v881 = vpop.f32.mrf.mxu0
        %v882 = vadd.f32 0.0, %v881
        %v883 = vpop.f32.mrf.mxu0
        %v884 = vadd.f32 0.0, %v883
        %v885 = vpop.f32.mrf.mxu0
        %v886 = vadd.f32 0.0, %v885
        %887 = vdwg.mxu0
        %v888 = vadd.f32 %v756, %v837
        %v889 = vadd.f32 %v757, %v839
        %v890 = vadd.f32 %v758, %v880
        %v891 = vadd.f32 %v759, %v882
        %v892 = vadd.f32 %v760, %v841
        %v893 = vadd.f32 %v761, %v843
        %v894 = vadd.f32 %v762, %v884
        %v895 = vadd.f32 %v763, %v886
        %v898 = vunpack.c.l.b16 %v235
        %v899 = vunpack.c.l.b16 %v236
        %v900 = vpack.c.b16 %v899, %v898
        %v902 = vcombine.high %v222, %v222
        %v904 = vunpack.c.l.s4 1983009808
        %v905 = vunpack.c.0.s8 %v904
        %v906 = vlaneseq
        %v907 = vshrl.u32 %v906, 7
        %v908 = vsub.s32 %v905, %v907
        %v909 = vrot.slane %v222, %v908
        %v911 = vunpack.c.l.s4 1983009808
        %v912 = vunpack.c.0.s8 %v911
        %v913 = vlaneseq
        %v914 = vshrl.u32 %v913, 7
        %v915 = vsub.s32 %v912, %v914
        %v916 = vrot.slane %v902, %v915
        %v917 = vcombine.high %v909, %v909
        %v918 = vcombine.high %v916, %v916
        %v920 = vsel %vm273, %v900, 0
        %v923 = vsel %vm277, %v909, 0
        %v926 = vsel %vm277, %v917, 0
        %v929 = vsel %vm277, %v916, 0
        %v932 = vsel %vm277, %v918, 0
        %934 = vmatprep.subr.bf16.mxu0 0
        %935 = vmatpush1.bf16.msra.mxu0 0
        %936 = vmatprep.subr.bf16.mxu0 0
        %937 = vmatpush1.bf16.msra.mxu0 0
        %938 = vmatprep.subr.bf16.mxu0 0
        %939 = vmatpush1.bf16.msra.mxu0 0
        %940 = vmatprep.subr.bf16.mxu0 0
        %941 = vmatpush1.bf16.msra.mxu0 0
        %942 = vmatprep.subr.bf16.mxu0 0
        %943 = vmatpush1.bf16.msra.mxu0 0
        %944 = vmatprep.subr.bf16.mxu0 0
        %945 = vmatpush1.bf16.msra.mxu0 0
        %946 = vmatprep.subr.bf16.mxu0 0
        %947 = vmatpush1.bf16.msra.mxu0 0
        %948 = vmatprep.subr.bf16.mxu0 %v926
        %949 = vmatpush1.bf16.msra.mxu0 %v923
        %950 = vmatprep.subr.bf16.mxu0 0
        %951 = vmatpush2.bf16.msra.mxu0 0
        %952 = vmatprep.subr.bf16.mxu0 0
        %953 = vmatpush2.bf16.msra.mxu0 0
        %954 = vmatprep.subr.bf16.mxu0 0
        %955 = vmatpush2.bf16.msra.mxu0 0
        %956 = vmatprep.subr.bf16.mxu0 0
        %957 = vmatpush2.bf16.msra.mxu0 0
        %958 = vmatprep.subr.bf16.mxu0 0
        %959 = vmatpush2.bf16.msra.mxu0 0
        %960 = vmatprep.subr.bf16.mxu0 0
        %961 = vmatpush2.bf16.msra.mxu0 0
        %962 = vmatprep.subr.bf16.mxu0 0
        %963 = vmatpush2.bf16.msra.mxu0 0
        %964 = vmatprep.subr.bf16.mxu0 0
        %965 = vmatpush2.bf16.msra.mxu0 0
        %966 = vmatprep.mubr.bf16.mxu0 0
        %967 = vmatmul.mubr.bf16.gmra.mxu0 %v920
        %v968 = vpop.f32.mrf.mxu0
        %v969 = vadd.f32 0.0, %v968
        %v970 = vpop.f32.mrf.mxu0
        %v971 = vadd.f32 0.0, %v970
        %v972 = vpop.f32.mrf.mxu0
        %v973 = vadd.f32 0.0, %v972
        %v974 = vpop.f32.mrf.mxu0
        %v975 = vadd.f32 0.0, %v974
        %976 = vdwg.mxu0
        %977 = vmatprep.subr.bf16.mxu0 0
        %978 = vmatpush1.bf16.msra.mxu0 0
        %979 = vmatprep.subr.bf16.mxu0 0
        %980 = vmatpush1.bf16.msra.mxu0 0
        %981 = vmatprep.subr.bf16.mxu0 0
        %982 = vmatpush1.bf16.msra.mxu0 0
        %983 = vmatprep.subr.bf16.mxu0 0
        %984 = vmatpush1.bf16.msra.mxu0 0
        %985 = vmatprep.subr.bf16.mxu0 0
        %986 = vmatpush1.bf16.msra.mxu0 0
        %987 = vmatprep.subr.bf16.mxu0 0
        %988 = vmatpush1.bf16.msra.mxu0 0
        %989 = vmatprep.subr.bf16.mxu0 0
        %990 = vmatpush1.bf16.msra.mxu0 0
        %991 = vmatprep.subr.bf16.mxu0 %v932
        %992 = vmatpush1.bf16.msra.mxu0 %v929
        %993 = vmatprep.subr.bf16.mxu0 0
        %994 = vmatpush2.bf16.msra.mxu0 0
        %995 = vmatprep.subr.bf16.mxu0 0
        %996 = vmatpush2.bf16.msra.mxu0 0
        %997 = vmatprep.subr.bf16.mxu0 0
        %998 = vmatpush2.bf16.msra.mxu0 0
        %999 = vmatprep.subr.bf16.mxu0 0
        %1000 = vmatpush2.bf16.msra.mxu0 0
        %1001 = vmatprep.subr.bf16.mxu0 0
        %1002 = vmatpush2.bf16.msra.mxu0 0
        %1003 = vmatprep.subr.bf16.mxu0 0
        %1004 = vmatpush2.bf16.msra.mxu0 0
        %1005 = vmatprep.subr.bf16.mxu0 0
        %1006 = vmatpush2.bf16.msra.mxu0 0
        %1007 = vmatprep.subr.bf16.mxu0 0
        %1008 = vmatpush2.bf16.msra.mxu0 0
        %1009 = vmatprep.mubr.bf16.mxu0 0
        %1010 = vmatmul.mubr.bf16.gmra.mxu0 %v920
        %v1011 = vpop.f32.mrf.mxu0
        %v1012 = vadd.f32 0.0, %v1011
        %v1013 = vpop.f32.mrf.mxu0
        %v1014 = vadd.f32 0.0, %v1013
        %v1015 = vpop.f32.mrf.mxu0
        %v1016 = vadd.f32 0.0, %v1015
        %v1017 = vpop.f32.mrf.mxu0
        %v1018 = vadd.f32 0.0, %v1017
        %1019 = vdwg.mxu0
        %v1020 = vadd.f32 %v888, %v969
        %v1021 = vadd.f32 %v889, %v971
        %v1022 = vadd.f32 %v890, %v1012
        %v1023 = vadd.f32 %v891, %v1014
        %v1024 = vadd.f32 %v892, %v973
        %v1025 = vadd.f32 %v893, %v975
        %v1026 = vadd.f32 %v894, %v1016
        %v1027 = vadd.f32 %v895, %v1018
        %v1030 = vunpack.c.l.b16 %v237
        %v1031 = vunpack.c.l.b16 %v238
        %v1032 = vpack.c.b16 %v1031, %v1030
        %v1034 = vcombine.high %v223, %v223
        %v1036 = vunpack.c.l.s4 1983009808
        %v1037 = vunpack.c.0.s8 %v1036
        %v1038 = vlaneseq
        %v1039 = vshrl.u32 %v1038, 7
        %v1040 = vsub.s32 %v1037, %v1039
        %v1041 = vrot.slane %v223, %v1040
        %v1043 = vunpack.c.l.s4 1983009808
        %v1044 = vunpack.c.0.s8 %v1043
        %v1045 = vlaneseq
        %v1046 = vshrl.u32 %v1045, 7
        %v1047 = vsub.s32 %v1044, %v1046
        %v1048 = vrot.slane %v1034, %v1047
        %v1049 = vcombine.high %v1041, %v1041
        %v1050 = vcombine.high %v1048, %v1048
        %v1052 = vsel %vm273, %v1032, 0
        %v1055 = vsel %vm277, %v1041, 0
        %v1058 = vsel %vm277, %v1049, 0
        %v1061 = vsel %vm277, %v1048, 0
        %v1064 = vsel %vm277, %v1050, 0
        %1066 = vmatprep.subr.bf16.mxu0 0
        %1067 = vmatpush1.bf16.msra.mxu0 0
        %1068 = vmatprep.subr.bf16.mxu0 0
        %1069 = vmatpush1.bf16.msra.mxu0 0
        %1070 = vmatprep.subr.bf16.mxu0 0
        %1071 = vmatpush1.bf16.msra.mxu0 0
        %1072 = vmatprep.subr.bf16.mxu0 0
        %1073 = vmatpush1.bf16.msra.mxu0 0
        %1074 = vmatprep.subr.bf16.mxu0 0
        %1075 = vmatpush1.bf16.msra.mxu0 0
        %1076 = vmatprep.subr.bf16.mxu0 0
        %1077 = vmatpush1.bf16.msra.mxu0 0
        %1078 = vmatprep.subr.bf16.mxu0 0
        %1079 = vmatpush1.bf16.msra.mxu0 0
        %1080 = vmatprep.subr.bf16.mxu0 %v1058
        %1081 = vmatpush1.bf16.msra.mxu0 %v1055
        %1082 = vmatprep.subr.bf16.mxu0 0
        %1083 = vmatpush2.bf16.msra.mxu0 0
        %1084 = vmatprep.subr.bf16.mxu0 0
        %1085 = vmatpush2.bf16.msra.mxu0 0
        %1086 = vmatprep.subr.bf16.mxu0 0
        %1087 = vmatpush2.bf16.msra.mxu0 0
        %1088 = vmatprep.subr.bf16.mxu0 0
        %1089 = vmatpush2.bf16.msra.mxu0 0
        %1090 = vmatprep.subr.bf16.mxu0 0
        %1091 = vmatpush2.bf16.msra.mxu0 0
        %1092 = vmatprep.subr.bf16.mxu0 0
        %1093 = vmatpush2.bf16.msra.mxu0 0
        %1094 = vmatprep.subr.bf16.mxu0 0
        %1095 = vmatpush2.bf16.msra.mxu0 0
        %1096 = vmatprep.subr.bf16.mxu0 0
        %1097 = vmatpush2.bf16.msra.mxu0 0
        %1098 = vmatprep.mubr.bf16.mxu0 0
        %1099 = vmatmul.mubr.bf16.gmra.mxu0 %v1052
        %v1100 = vpop.f32.mrf.mxu0
        %v1101 = vadd.f32 0.0, %v1100
        %v1102 = vpop.f32.mrf.mxu0
        %v1103 = vadd.f32 0.0, %v1102
        %v1104 = vpop.f32.mrf.mxu0
        %v1105 = vadd.f32 0.0, %v1104
        %v1106 = vpop.f32.mrf.mxu0
        %v1107 = vadd.f32 0.0, %v1106
        %1108 = vdwg.mxu0
        %1109 = vmatprep.subr.bf16.mxu0 0
        %1110 = vmatpush1.bf16.msra.mxu0 0
        %1111 = vmatprep.subr.bf16.mxu0 0
        %1112 = vmatpush1.bf16.msra.mxu0 0
        %1113 = vmatprep.subr.bf16.mxu0 0
        %1114 = vmatpush1.bf16.msra.mxu0 0
        %1115 = vmatprep.subr.bf16.mxu0 0
        %1116 = vmatpush1.bf16.msra.mxu0 0
        %1117 = vmatprep.subr.bf16.mxu0 0
        %1118 = vmatpush1.bf16.msra.mxu0 0
        %1119 = vmatprep.subr.bf16.mxu0 0
        %1120 = vmatpush1.bf16.msra.mxu0 0
        %1121 = vmatprep.subr.bf16.mxu0 0
        %1122 = vmatpush1.bf16.msra.mxu0 0
        %1123 = vmatprep.subr.bf16.mxu0 %v1064
        %1124 = vmatpush1.bf16.msra.mxu0 %v1061
        %1125 = vmatprep.subr.bf16.mxu0 0
        %1126 = vmatpush2.bf16.msra.mxu0 0
        %1127 = vmatprep.subr.bf16.mxu0 0
        %1128 = vmatpush2.bf16.msra.mxu0 0
        %1129 = vmatprep.subr.bf16.mxu0 0
        %1130 = vmatpush2.bf16.msra.mxu0 0
        %1131 = vmatprep.subr.bf16.mxu0 0
        %1132 = vmatpush2.bf16.msra.mxu0 0
        %1133 = vmatprep.subr.bf16.mxu0 0
        %1134 = vmatpush2.bf16.msra.mxu0 0
        %1135 = vmatprep.subr.bf16.mxu0 0
        %1136 = vmatpush2.bf16.msra.mxu0 0
        %1137 = vmatprep.subr.bf16.mxu0 0
        %1138 = vmatpush2.bf16.msra.mxu0 0
        %1139 = vmatprep.subr.bf16.mxu0 0
        %1140 = vmatpush2.bf16.msra.mxu0 0
        %1141 = vmatprep.mubr.bf16.mxu0 0
        %1142 = vmatmul.mubr.bf16.gmra.mxu0 %v1052
        %v1143 = vpop.f32.mrf.mxu0
        %v1144 = vadd.f32 0.0, %v1143
        %v1145 = vpop.f32.mrf.mxu0
        %v1146 = vadd.f32 0.0, %v1145
        %v1147 = vpop.f32.mrf.mxu0
        %v1148 = vadd.f32 0.0, %v1147
        %v1149 = vpop.f32.mrf.mxu0
        %v1150 = vadd.f32 0.0, %v1149
        %1151 = vdwg.mxu0
        %v1152 = vadd.f32 %v1020, %v1101
        %v1153 = vadd.f32 %v1021, %v1103
        %v1154 = vadd.f32 %v1022, %v1144
        %v1155 = vadd.f32 %v1023, %v1146
        %v1156 = vadd.f32 %v1024, %v1105
        %v1157 = vadd.f32 %v1025, %v1107
        %v1158 = vadd.f32 %v1026, %v1148
        %v1159 = vadd.f32 %v1027, %v1150
        %v1162 = vunpack.c.l.b16 %v239
        %v1163 = vunpack.c.l.b16 %v240
        %v1164 = vpack.c.b16 %v1163, %v1162
        %v1166 = vcombine.high %v224, %v224
        %v1168 = vunpack.c.l.s4 1983009808
        %v1169 = vunpack.c.0.s8 %v1168
        %v1170 = vlaneseq
        %v1171 = vshrl.u32 %v1170, 7
        %v1172 = vsub.s32 %v1169, %v1171
        %v1173 = vrot.slane %v224, %v1172
        %v1175 = vunpack.c.l.s4 1983009808
        %v1176 = vunpack.c.0.s8 %v1175
        %v1177 = vlaneseq
        %v1178 = vshrl.u32 %v1177, 7
        %v1179 = vsub.s32 %v1176, %v1178
        %v1180 = vrot.slane %v1166, %v1179
        %v1181 = vcombine.high %v1173, %v1173
        %v1182 = vcombine.high %v1180, %v1180
        %v1184 = vsel %vm273, %v1164, 0
        %v1187 = vsel %vm277, %v1173, 0
        %v1190 = vsel %vm277, %v1181, 0
        %v1193 = vsel %vm277, %v1180, 0
        %v1196 = vsel %vm277, %v1182, 0
        %1198 = vmatprep.subr.bf16.mxu0 0
        %1199 = vmatpush1.bf16.msra.mxu0 0
        %1200 = vmatprep.subr.bf16.mxu0 0
        %1201 = vmatpush1.bf16.msra.mxu0 0
        %1202 = vmatprep.subr.bf16.mxu0 0
        %1203 = vmatpush1.bf16.msra.mxu0 0
        %1204 = vmatprep.subr.bf16.mxu0 0
        %1205 = vmatpush1.bf16.msra.mxu0 0
        %1206 = vmatprep.subr.bf16.mxu0 0
        %1207 = vmatpush1.bf16.msra.mxu0 0
        %1208 = vmatprep.subr.bf16.mxu0 0
        %1209 = vmatpush1.bf16.msra.mxu0 0
        %1210 = vmatprep.subr.bf16.mxu0 0
        %1211 = vmatpush1.bf16.msra.mxu0 0
        %1212 = vmatprep.subr.bf16.mxu0 %v1190
        %1213 = vmatpush1.bf16.msra.mxu0 %v1187
        %1214 = vmatprep.subr.bf16.mxu0 0
        %1215 = vmatpush2.bf16.msra.mxu0 0
        %1216 = vmatprep.subr.bf16.mxu0 0
        %1217 = vmatpush2.bf16.msra.mxu0 0
        %1218 = vmatprep.subr.bf16.mxu0 0
        %1219 = vmatpush2.bf16.msra.mxu0 0
        %1220 = vmatprep.subr.bf16.mxu0 0
        %1221 = vmatpush2.bf16.msra.mxu0 0
        %1222 = vmatprep.subr.bf16.mxu0 0
        %1223 = vmatpush2.bf16.msra.mxu0 0
        %1224 = vmatprep.subr.bf16.mxu0 0
        %1225 = vmatpush2.bf16.msra.mxu0 0
        %1226 = vmatprep.subr.bf16.mxu0 0
        %1227 = vmatpush2.bf16.msra.mxu0 0
        %1228 = vmatprep.subr.bf16.mxu0 0
        %1229 = vmatpush2.bf16.msra.mxu0 0
        %1230 = vmatprep.mubr.bf16.mxu0 0
        %1231 = vmatmul.mubr.bf16.gmra.mxu0 %v1184
        %v1232 = vpop.f32.mrf.mxu0
        %v1233 = vadd.f32 0.0, %v1232
        %v1234 = vpop.f32.mrf.mxu0
        %v1235 = vadd.f32 0.0, %v1234
        %v1236 = vpop.f32.mrf.mxu0
        %v1237 = vadd.f32 0.0, %v1236
        %v1238 = vpop.f32.mrf.mxu0
        %v1239 = vadd.f32 0.0, %v1238
        %1240 = vdwg.mxu0
        %1241 = vmatprep.subr.bf16.mxu0 0
        %1242 = vmatpush1.bf16.msra.mxu0 0
        %1243 = vmatprep.subr.bf16.mxu0 0
        %1244 = vmatpush1.bf16.msra.mxu0 0
        %1245 = vmatprep.subr.bf16.mxu0 0
        %1246 = vmatpush1.bf16.msra.mxu0 0
        %1247 = vmatprep.subr.bf16.mxu0 0
        %1248 = vmatpush1.bf16.msra.mxu0 0
        %1249 = vmatprep.subr.bf16.mxu0 0
        %1250 = vmatpush1.bf16.msra.mxu0 0
        %1251 = vmatprep.subr.bf16.mxu0 0
        %1252 = vmatpush1.bf16.msra.mxu0 0
        %1253 = vmatprep.subr.bf16.mxu0 0
        %1254 = vmatpush1.bf16.msra.mxu0 0
        %1255 = vmatprep.subr.bf16.mxu0 %v1196
        %1256 = vmatpush1.bf16.msra.mxu0 %v1193
        %1257 = vmatprep.subr.bf16.mxu0 0
        %1258 = vmatpush2.bf16.msra.mxu0 0
        %1259 = vmatprep.subr.bf16.mxu0 0
        %1260 = vmatpush2.bf16.msra.mxu0 0
        %1261 = vmatprep.subr.bf16.mxu0 0
        %1262 = vmatpush2.bf16.msra.mxu0 0
        %1263 = vmatprep.subr.bf16.mxu0 0
        %1264 = vmatpush2.bf16.msra.mxu0 0
        %1265 = vmatprep.subr.bf16.mxu0 0
        %1266 = vmatpush2.bf16.msra.mxu0 0
        %1267 = vmatprep.subr.bf16.mxu0 0
        %1268 = vmatpush2.bf16.msra.mxu0 0
        %1269 = vmatprep.subr.bf16.mxu0 0
        %1270 = vmatpush2.bf16.msra.mxu0 0
        %1271 = vmatprep.subr.bf16.mxu0 0
        %1272 = vmatpush2.bf16.msra.mxu0 0
        %1273 = vmatprep.mubr.bf16.mxu0 0
        %1274 = vmatmul.mubr.bf16.gmra.mxu0 %v1184
        %v1275 = vpop.f32.mrf.mxu0
        %v1276 = vadd.f32 0.0, %v1275
        %v1277 = vpop.f32.mrf.mxu0
        %v1278 = vadd.f32 0.0, %v1277
        %v1279 = vpop.f32.mrf.mxu0
        %v1280 = vadd.f32 0.0, %v1279
        %v1281 = vpop.f32.mrf.mxu0
        %v1282 = vadd.f32 0.0, %v1281
        %1283 = vdwg.mxu0
        %v1284 = vadd.f32 %v1152, %v1233
        %v1285 = vadd.f32 %v1153, %v1235
        %v1286 = vadd.f32 %v1154, %v1276
        %v1287 = vadd.f32 %v1155, %v1278
        %v1288 = vadd.f32 %v1156, %v1237
        %v1289 = vadd.f32 %v1157, %v1239
        %v1290 = vadd.f32 %v1158, %v1280
        %v1291 = vadd.f32 %v1159, %v1282
        %v1292 = vadd.f32 %v1284, %v1285
        %v1293 = vadd.f32 %v1292, %v1286
        %v1294 = vadd.f32 %v1293, %v1287
        %1295 = vadd.xlane.f32.xlu0 %v1294
        %v1296 = vpop.xlane.xlu0 %1295
        %v1297 = vrcp.pop 512.0
        %v1298 = vmul.f32 %v1296, %v1297
        %v1299 = vsub.f32 %v1284, %v1298
        %v1300 = vsub.f32 %v1285, %v1298
        %v1301 = vsub.f32 %v1286, %v1298
        %v1302 = vsub.f32 %v1287, %v1298
        %v1303 = vmul.f32 %v1299, %v1299
        %v1304 = vmul.f32 %v1300, %v1300
        %v1305 = vmul.f32 %v1301, %v1301
        %v1306 = vmul.f32 %v1302, %v1302
        %v1307 = vadd.f32 %v1303, %v1304
        %v1308 = vadd.f32 %v1307, %v1305
        %v1309 = vadd.f32 %v1308, %v1306
        %1310 = vadd.xlane.f32.xlu0 %v1309
        %v1311 = vpop.xlane.xlu0 %1310
        %v1312 = vmul.f32 %v1311, %v1297
        %v1313 = vadd.f32 %v1312, 1e-05
        %v1314 = vrsqrt.pop %v1313
        %v1315 = vmul.f32 %v1299, %v1314
        %v1316 = vmul.f32 %v1300, %v1314
        %v1317 = vmul.f32 %v1301, %v1314
        %v1318 = vmul.f32 %v1302, %v1314
        %vm1319 = vcmp.ge.f32.partialorder %v1315, 0.0
        %vm1320 = vcmp.ge.f32.partialorder %v1316, 0.0
        %vm1321 = vcmp.ge.f32.partialorder %v1317, 0.0
        %vm1322 = vcmp.ge.f32.partialorder %v1318, 0.0
        %v1323 = vmul.f32 %v1315, 0.3
        %v1324 = vmul.f32 %v1316, 0.3
        %v1325 = vmul.f32 %v1317, 0.3
        %v1326 = vmul.f32 %v1318, 0.3
        %v1327 = vsel %vm1319, %v1315, %v1323
        %v1328 = vsel %vm1320, %v1316, %v1324
        %v1329 = vsel %vm1321, %v1317, %v1325
        %v1330 = vsel %vm1322, %v1318, %v1326
        %v1331 = vld [vmem:[%s2] sm:$0xf]
        %v1334 = vcombine.high %v248, %v248
        %v1335 = vcombine.high %v249, %v249
        %v1337 = vsel %vm273, %v1331, 0
        %vm1339 = vcmask 1043456
        %v1340 = vsel %vm1339, %v248, 0
        %v1342 = vsel %vm1339, %v1334, 0
        %v1344 = vsel %vm1339, %v249, 0
        %v1346 = vsel %vm1339, %v1335, 0
        %1348 = vmatprep.subr.mxu0 0.0
        %1349 = vmatpush1.msra.mxu0 0.0
        %1350 = vmatprep.subr.mxu0 0.0
        %1351 = vmatpush1.msra.mxu0 0.0
        %1352 = vmatprep.subr.mxu0 0.0
        %1353 = vmatpush1.msra.mxu0 0.0
        %1354 = vmatprep.subr.mxu0 0.0
        %1355 = vmatpush1.msra.mxu0 0.0
        %1356 = vmatprep.subr.mxu0 0.0
        %1357 = vmatpush1.msra.mxu0 0.0
        %1358 = vmatprep.subr.mxu0 0.0
        %1359 = vmatpush1.msra.mxu0 0.0
        %1360 = vmatprep.subr.mxu0 0.0
        %1361 = vmatpush1.msra.mxu0 0.0
        %1362 = vmatprep.subr.mxu0 0.0
        %1363 = vmatpush1.msra.mxu0 0.0
        %1364 = vmatprep.subr.mxu0 0.0
        %1365 = vmatpush1.msra.mxu0 0.0
        %1366 = vmatprep.subr.mxu0 0.0
        %1367 = vmatpush1.msra.mxu0 0.0
        %1368 = vmatprep.subr.mxu0 0.0
        %1369 = vmatpush1.msra.mxu0 0.0
        %1370 = vmatprep.subr.mxu0 0.0
        %1371 = vmatpush1.msra.mxu0 0.0
        %1372 = vmatprep.subr.mxu0 0.0
        %1373 = vmatpush1.msra.mxu0 0.0
        %1374 = vmatprep.subr.mxu0 0.0
        %1375 = vmatpush1.msra.mxu0 0.0
        %1376 = vmatprep.subr.mxu0 0.0
        %1377 = vmatpush1.msra.mxu0 0.0
        %1378 = vmatprep.subr.mxu0 %v1342
        %1379 = vmatpush1.msra.mxu0 %v1340
        %1380 = vmatprep.subr.mxu0 0.0
        %1381 = vmatpush2.msra.mxu0 0.0
        %1382 = vmatprep.subr.mxu0 0.0
        %1383 = vmatpush2.msra.mxu0 0.0
        %1384 = vmatprep.subr.mxu0 0.0
        %1385 = vmatpush2.msra.mxu0 0.0
        %1386 = vmatprep.subr.mxu0 0.0
        %1387 = vmatpush2.msra.mxu0 0.0
        %1388 = vmatprep.subr.mxu0 0.0
        %1389 = vmatpush2.msra.mxu0 0.0
        %1390 = vmatprep.subr.mxu0 0.0
        %1391 = vmatpush2.msra.mxu0 0.0
        %1392 = vmatprep.subr.mxu0 0.0
        %1393 = vmatpush2.msra.mxu0 0.0
        %1394 = vmatprep.subr.mxu0 0.0
        %1395 = vmatpush2.msra.mxu0 0.0
        %1396 = vmatprep.subr.mxu0 0.0
        %1397 = vmatpush2.msra.mxu0 0.0
        %1398 = vmatprep.subr.mxu0 0.0
        %1399 = vmatpush2.msra.mxu0 0.0
        %1400 = vmatprep.subr.mxu0 0.0
        %1401 = vmatpush2.msra.mxu0 0.0
        %1402 = vmatprep.subr.mxu0 0.0
        %1403 = vmatpush2.msra.mxu0 0.0
        %1404 = vmatprep.subr.mxu0 0.0
        %1405 = vmatpush2.msra.mxu0 0.0
        %1406 = vmatprep.subr.mxu0 0.0
        %1407 = vmatpush2.msra.mxu0 0.0
        %1408 = vmatprep.subr.mxu0 0.0
        %1409 = vmatpush2.msra.mxu0 0.0
        %1410 = vmatprep.subr.mxu0 0.0
        %1411 = vmatpush2.msra.mxu0 0.0
        %1412 = vmatprep.mubr.f32.mxu0 0.0
        %1413 = vmatmul.mubr.f32.gmra.mxu0 %v1337
        %v1414 = vpop.f32.mrf.mxu0
        %v1415 = vadd.f32 %v1288, %v1414
        %v1416 = vpop.f32.mrf.mxu0
        %v1417 = vadd.f32 %v1289, %v1416
        %1418 = vdwg.mxu0
        %1419 = vmatprep.subr.mxu0 0.0
        %1420 = vmatpush1.msra.mxu0 0.0
        %1421 = vmatprep.subr.mxu0 0.0
        %1422 = vmatpush1.msra.mxu0 0.0
        %1423 = vmatprep.subr.mxu0 0.0
        %1424 = vmatpush1.msra.mxu0 0.0
        %1425 = vmatprep.subr.mxu0 0.0
        %1426 = vmatpush1.msra.mxu0 0.0
        %1427 = vmatprep.subr.mxu0 0.0
        %1428 = vmatpush1.msra.mxu0 0.0
        %1429 = vmatprep.subr.mxu0 0.0
        %1430 = vmatpush1.msra.mxu0 0.0
        %1431 = vmatprep.subr.mxu0 0.0
        %1432 = vmatpush1.msra.mxu0 0.0
        %1433 = vmatprep.subr.mxu0 0.0
        %1434 = vmatpush1.msra.mxu0 0.0
        %1435 = vmatprep.subr.mxu0 0.0
        %1436 = vmatpush1.msra.mxu0 0.0
        %1437 = vmatprep.subr.mxu0 0.0
        %1438 = vmatpush1.msra.mxu0 0.0
        %1439 = vmatprep.subr.mxu0 0.0
        %1440 = vmatpush1.msra.mxu0 0.0
        %1441 = vmatprep.subr.mxu0 0.0
        %1442 = vmatpush1.msra.mxu0 0.0
        %1443 = vmatprep.subr.mxu0 0.0
        %1444 = vmatpush1.msra.mxu0 0.0
        %1445 = vmatprep.subr.mxu0 0.0
        %1446 = vmatpush1.msra.mxu0 0.0
        %1447 = vmatprep.subr.mxu0 0.0
        %1448 = vmatpush1.msra.mxu0 0.0
        %1449 = vmatprep.subr.mxu0 %v1346
        %1450 = vmatpush1.msra.mxu0 %v1344
        %1451 = vmatprep.subr.mxu0 0.0
        %1452 = vmatpush2.msra.mxu0 0.0
        %1453 = vmatprep.subr.mxu0 0.0
        %1454 = vmatpush2.msra.mxu0 0.0
        %1455 = vmatprep.subr.mxu0 0.0
        %1456 = vmatpush2.msra.mxu0 0.0
        %1457 = vmatprep.subr.mxu0 0.0
        %1458 = vmatpush2.msra.mxu0 0.0
        %1459 = vmatprep.subr.mxu0 0.0
        %1460 = vmatpush2.msra.mxu0 0.0
        %1461 = vmatprep.subr.mxu0 0.0
        %1462 = vmatpush2.msra.mxu0 0.0
        %1463 = vmatprep.subr.mxu0 0.0
        %1464 = vmatpush2.msra.mxu0 0.0
        %1465 = vmatprep.subr.mxu0 0.0
        %1466 = vmatpush2.msra.mxu0 0.0
        %1467 = vmatprep.subr.mxu0 0.0
        %1468 = vmatpush2.msra.mxu0 0.0
        %1469 = vmatprep.subr.mxu0 0.0
        %1470 = vmatpush2.msra.mxu0 0.0
        %1471 = vmatprep.subr.mxu0 0.0
        %1472 = vmatpush2.msra.mxu0 0.0
        %1473 = vmatprep.subr.mxu0 0.0
        %1474 = vmatpush2.msra.mxu0 0.0
        %1475 = vmatprep.subr.mxu0 0.0
        %1476 = vmatpush2.msra.mxu0 0.0
        %1477 = vmatprep.subr.mxu0 0.0
        %1478 = vmatpush2.msra.mxu0 0.0
        %1479 = vmatprep.subr.mxu0 0.0
        %1480 = vmatpush2.msra.mxu0 0.0
        %1481 = vmatprep.subr.mxu0 0.0
        %1482 = vmatpush2.msra.mxu0 0.0
        %1483 = vmatprep.mubr.f32.mxu0 0.0
        %1484 = vmatmul.mubr.f32.gmra.mxu0 %v1337
        %v1485 = vpop.f32.mrf.mxu0
        %v1486 = vadd.f32 %v1290, %v1485
        %v1487 = vpop.f32.mrf.mxu0
        %v1488 = vadd.f32 %v1291, %v1487
        %1489 = vdwg.mxu0
        %v1490 = vld [vmem:[%s3] sm:$0xf]
        %vm1491 = vcmask 64512
        %v1493 = vsel %vm1491, %v1490, 0
        %1495 = vmatprep.subr.mxu0 0.0
        %1496 = vmatpush1.msra.mxu0 0.0
        %1497 = vmatprep.subr.mxu0 0.0
        %1498 = vmatpush1.msra.mxu0 0.0
        %1499 = vmatprep.subr.mxu0 0.0
        %1500 = vmatpush1.msra.mxu0 0.0
        %1501 = vmatprep.subr.mxu0 0.0
        %1502 = vmatpush1.msra.mxu0 0.0
        %1503 = vmatprep.subr.mxu0 0.0
        %1504 = vmatpush1.msra.mxu0 0.0
        %1505 = vmatprep.subr.mxu0 0.0
        %1506 = vmatpush1.msra.mxu0 0.0
        %1507 = vmatprep.subr.mxu0 0.0
        %1508 = vmatpush1.msra.mxu0 0.0
        %1509 = vmatprep.subr.mxu0 0.0
        %1510 = vmatpush1.msra.mxu0 0.0
        %1511 = vmatprep.subr.mxu0 0.0
        %1512 = vmatpush1.msra.mxu0 0.0
        %1513 = vmatprep.subr.mxu0 0.0
        %1514 = vmatpush1.msra.mxu0 0.0
        %1515 = vmatprep.subr.mxu0 0.0
        %1516 = vmatpush1.msra.mxu0 0.0
        %1517 = vmatprep.subr.mxu0 0.0
        %1518 = vmatpush1.msra.mxu0 0.0
        %1519 = vmatprep.subr.mxu0 0.0
        %1520 = vmatpush1.msra.mxu0 0.0
        %1521 = vmatprep.subr.mxu0 0.0
        %1522 = vmatpush1.msra.mxu0 0.0
        %1523 = vmatprep.subr.mxu0 0.0
        %1524 = vmatpush1.msra.mxu0 0.0
        %1525 = vmatprep.subr.mxu0 %v1328
        %1526 = vmatpush1.msra.mxu0 %v1327
        %1527 = vmatprep.subr.mxu0 0.0
        %1528 = vmatpush2.msra.mxu0 0.0
        %1529 = vmatprep.subr.mxu0 0.0
        %1530 = vmatpush2.msra.mxu0 0.0
        %1531 = vmatprep.subr.mxu0 0.0
        %1532 = vmatpush2.msra.mxu0 0.0
        %1533 = vmatprep.subr.mxu0 0.0
        %1534 = vmatpush2.msra.mxu0 0.0
        %1535 = vmatprep.subr.mxu0 0.0
        %1536 = vmatpush2.msra.mxu0 0.0
        %1537 = vmatprep.subr.mxu0 0.0
        %1538 = vmatpush2.msra.mxu0 0.0
        %1539 = vmatprep.subr.mxu0 0.0
        %1540 = vmatpush2.msra.mxu0 0.0
        %1541 = vmatprep.subr.mxu0 0.0
        %1542 = vmatpush2.msra.mxu0 0.0
        %1543 = vmatprep.subr.mxu0 0.0
        %1544 = vmatpush2.msra.mxu0 0.0
        %1545 = vmatprep.subr.mxu0 0.0
        %1546 = vmatpush2.msra.mxu0 0.0
        %1547 = vmatprep.subr.mxu0 0.0
        %1548 = vmatpush2.msra.mxu0 0.0
        %1549 = vmatprep.subr.mxu0 0.0
        %1550 = vmatpush2.msra.mxu0 0.0
        %1551 = vmatprep.subr.mxu0 0.0
        %1552 = vmatpush2.msra.mxu0 0.0
        %1553 = vmatprep.subr.mxu0 0.0
        %1554 = vmatpush2.msra.mxu0 0.0
        %1555 = vmatprep.subr.mxu0 0.0
        %1556 = vmatpush2.msra.mxu0 0.0
        %1557 = vmatprep.subr.mxu0 0.0
        %1558 = vmatpush2.msra.mxu0 0.0
        %1559 = vmatprep.mubr.f32.mxu0 0.0
        %1560 = vmatmul.mubr.f32.gmra.mxu0 %v1493
        %v1561 = vpop.f32.mrf.mxu0
        %v1562 = vadd.f32 0.0, %v1561
        %v1563 = vpop.f32.mrf.mxu0
        %v1564 = vadd.f32 0.0, %v1563
        %1565 = vdwg.mxu0
        %1566 = vmatprep.subr.mxu0 0.0
        %1567 = vmatpush1.msra.mxu0 0.0
        %1568 = vmatprep.subr.mxu0 0.0
        %1569 = vmatpush1.msra.mxu0 0.0
        %1570 = vmatprep.subr.mxu0 0.0
        %1571 = vmatpush1.msra.mxu0 0.0
        %1572 = vmatprep.subr.mxu0 0.0
        %1573 = vmatpush1.msra.mxu0 0.0
        %1574 = vmatprep.subr.mxu0 0.0
        %1575 = vmatpush1.msra.mxu0 0.0
        %1576 = vmatprep.subr.mxu0 0.0
        %1577 = vmatpush1.msra.mxu0 0.0
        %1578 = vmatprep.subr.mxu0 0.0
        %1579 = vmatpush1.msra.mxu0 0.0
        %1580 = vmatprep.subr.mxu0 0.0
        %1581 = vmatpush1.msra.mxu0 0.0
        %1582 = vmatprep.subr.mxu0 0.0
        %1583 = vmatpush1.msra.mxu0 0.0
        %1584 = vmatprep.subr.mxu0 0.0
        %1585 = vmatpush1.msra.mxu0 0.0
        %1586 = vmatprep.subr.mxu0 0.0
        %1587 = vmatpush1.msra.mxu0 0.0
        %1588 = vmatprep.subr.mxu0 0.0
        %1589 = vmatpush1.msra.mxu0 0.0
        %1590 = vmatprep.subr.mxu0 0.0
        %1591 = vmatpush1.msra.mxu0 0.0
        %1592 = vmatprep.subr.mxu0 0.0
        %1593 = vmatpush1.msra.mxu0 0.0
        %1594 = vmatprep.subr.mxu0 0.0
        %1595 = vmatpush1.msra.mxu0 0.0
        %1596 = vmatprep.subr.mxu0 %v1330
        %1597 = vmatpush1.msra.mxu0 %v1329
        %1598 = vmatprep.subr.mxu0 0.0
        %1599 = vmatpush2.msra.mxu0 0.0
        %1600 = vmatprep.subr.mxu0 0.0
        %1601 = vmatpush2.msra.mxu0 0.0
        %1602 = vmatprep.subr.mxu0 0.0
        %1603 = vmatpush2.msra.mxu0 0.0
        %1604 = vmatprep.subr.mxu0 0.0
        %1605 = vmatpush2.msra.mxu0 0.0
        %1606 = vmatprep.subr.mxu0 0.0
        %1607 = vmatpush2.msra.mxu0 0.0
        %1608 = vmatprep.subr.mxu0 0.0
        %1609 = vmatpush2.msra.mxu0 0.0
        %1610 = vmatprep.subr.mxu0 0.0
        %1611 = vmatpush2.msra.mxu0 0.0
        %1612 = vmatprep.subr.mxu0 0.0
        %1613 = vmatpush2.msra.mxu0 0.0
        %1614 = vmatprep.subr.mxu0 0.0
        %1615 = vmatpush2.msra.mxu0 0.0
        %1616 = vmatprep.subr.mxu0 0.0
        %1617 = vmatpush2.msra.mxu0 0.0
        %1618 = vmatprep.subr.mxu0 0.0
        %1619 = vmatpush2.msra.mxu0 0.0
        %1620 = vmatprep.subr.mxu0 0.0
        %1621 = vmatpush2.msra.mxu0 0.0
        %1622 = vmatprep.subr.mxu0 0.0
        %1623 = vmatpush2.msra.mxu0 0.0
        %1624 = vmatprep.subr.mxu0 0.0
        %1625 = vmatpush2.msra.mxu0 0.0
        %1626 = vmatprep.subr.mxu0 0.0
        %1627 = vmatpush2.msra.mxu0 0.0
        %1628 = vmatprep.subr.mxu0 0.0
        %1629 = vmatpush2.msra.mxu0 0.0
        %1630 = vmatprep.mubr.f32.mxu0 0.0
        %1631 = vmatmul.mubr.f32.gmra.mxu0 %v1493
        %v1632 = vpop.f32.mrf.mxu0
        %v1633 = vadd.f32 0.0, %v1632
        %v1634 = vpop.f32.mrf.mxu0
        %v1635 = vadd.f32 0.0, %v1634
        %1636 = vdwg.mxu0
        %v1637 = vadd.f32 %v1415, %v1562
        %v1638 = vadd.f32 %v1417, %v1564
        %v1639 = vadd.f32 %v1486, %v1633
        %v1640 = vadd.f32 %v1488, %v1635
        %v1641 = vsel %vm1339, %v1637, 0.0
        %v1642 = vsel %vm1339, %v1638, 0.0
        %v1643 = vadd.f32 %v1641, %v1642
        %v1644 = vsel %vm1339, %v1639, 0.0
        %v1645 = vadd.f32 %v1643, %v1644
        %v1646 = vsel %vm1339, %v1640, 0.0
        %v1647 = vadd.f32 %v1645, %v1646
        %1648 = vadd.xlane.f32.xlu0 %v1647
        %v1649 = vpop.xlane.xlu0 %1648
        %v1650 = vmul.f32 %v1649, %v1297
        %v1651 = vsub.f32 %v1637, %v1650
        %v1652 = vsub.f32 %v1638, %v1650
        %v1653 = vsub.f32 %v1639, %v1650
        %v1654 = vsub.f32 %v1640, %v1650
        %v1655 = vmul.f32 %v1651, %v1651
        %v1656 = vmul.f32 %v1652, %v1652
        %v1657 = vmul.f32 %v1653, %v1653
        %v1658 = vmul.f32 %v1654, %v1654
        %v1659 = vsel %vm1339, %v1655, 0.0
        %v1660 = vsel %vm1339, %v1656, 0.0
        %v1661 = vadd.f32 %v1659, %v1660
        %v1662 = vsel %vm1339, %v1657, 0.0
        %v1663 = vadd.f32 %v1661, %v1662
        %v1664 = vsel %vm1339, %v1658, 0.0
        %v1665 = vadd.f32 %v1663, %v1664
        %1666 = vadd.xlane.f32.xlu0 %v1665
        %v1667 = vpop.xlane.xlu0 %1666
        %v1668 = vmul.f32 %v1667, %v1297
        %v1669 = vadd.f32 %v1668, 1e-05
        %v1670 = vrsqrt.pop %v1669
        %v1671 = vmul.f32 %v1651, %v1670
        %v1672 = vmul.f32 %v1652, %v1670
        %v1673 = vmul.f32 %v1653, %v1670
        %v1674 = vmul.f32 %v1654, %v1670
        %vm1675 = vcmp.ge.f32.partialorder %v1671, 0.0
        %vm1676 = vcmp.ge.f32.partialorder %v1672, 0.0
        %vm1677 = vcmp.ge.f32.partialorder %v1673, 0.0
        %vm1678 = vcmp.ge.f32.partialorder %v1674, 0.0
        %v1679 = vmul.f32 %v1671, 0.3
        %v1680 = vmul.f32 %v1672, 0.3
        %v1681 = vmul.f32 %v1673, 0.3
        %v1682 = vmul.f32 %v1674, 0.3
        %v1683 = vsel %vm1675, %v1671, %v1679
        %v1684 = vsel %vm1676, %v1672, %v1680
        %v1685 = vsel %vm1677, %v1673, %v1681
        %v1686 = vsel %vm1678, %v1674, %v1682
        %v1691 = vcombine.low %v1683, %v1684
        %v1692 = vcombine.low %v1685, %v1686
        %1695 = vst [vmem:[%s215] sm:$0xff] %v1691
        %1696 = vst [vmem:[%s215 + $0x8] sm:$0xff] %v1692
        %s1697 = sand.u32 %s118, 1
        %s1698 = scalar_lea.sflag [#allocation4], %s1697
        %s1699 = sand.u32 %s118, 1
        %s1700 = smul.addr %s1699, 16
        %s1701 = scalar_lea.vmem [#allocation5], %s1700
        // Predicated region
        $region41: #{tpu_custom_call.1} parent=35 // pred_check
          %p1702 = pneg %p128
        $region42: #{tpu_custom_call.1} parent=35 // pred_check_branch
          %1704 = sbr.rel (%p1702) target = $region44
        $region43: #{tpu_custom_call.1} parent=35 // pred_region
          %s1706 = ssub.s32 256, 256
          %1707 = vsyncadd %s1698, %s1706
          %s1708 = smul.addr %s21, 4
          %s1709 = smul.addr %s1708, 64
          %s1710 = scalar_lea.hbm %s4, %s1709
          %s1712 = sshll.u32 %s1701, 4
          %s1713 = int_to_ptr.vmem [resolvable:$true] %s1712
          %1715 = dma.vmem_to_hbm [thread:$0]  %s1713, 256, %s1710, %s1698
        $region44: #{tpu_custom_call.1} parent=35 // pred_fallthru
          _
      $region36: #{tpu_custom_call.1} parent=5 // pred_fallthru
        _
      %p1716 = scmp.le.s32.totalorder 2, %s16
      // Predicated region
      $region45: #{tpu_custom_call.1} parent=5 // pred_check
        %p1717 = pneg %p1716
      $region46: #{tpu_custom_call.1} parent=5 // pred_check_branch
        %1719 = sbr.rel (%p1717) target = $region48
      $region47: #{tpu_custom_call.1} parent=5 // pred_region
        %s1720 = ssub.s32 %s16, 2
        // Predicated region
        $region49: #{tpu_custom_call.1} parent=47 // pred_check
          %p1721 = pneg %p134
        $region50: #{tpu_custom_call.1} parent=47 // pred_check_branch
          %1723 = sbr.rel (%p1721) target = $region52
        $region51: #{tpu_custom_call.1} parent=47 // pred_region
          %s1724 = sand.u32 %s119, 1
          %s1725 = scalar_lea.sflag [#allocation4], %s1724
          %s1726 = sand.u32 %s119, 1
          %s1727 = smul.addr %s1726, 16
          %s1728 = scalar_lea.vmem [#allocation5], %s1727
          %1729 = dma.done %s1725, 256
        $region52: #{tpu_custom_call.1} parent=47 // pred_fallthru
          _
      $region48: #{tpu_custom_call.1} parent=5 // pred_fallthru
        _
    $region6: #{tpu_custom_call.1} parent=1 // loop_footer
      %s20 = sadd.s32 1, %s16
    $region7: #{tpu_custom_call.1} parent=1 // loop_footer_branch
      %15 = sbr.rel target = $region3
    $region8: #{tpu_custom_call.1} parent=1 // loop_exit
      _
    %1730 = vsyncpa [#allocation3], 1
    %s1731 = scalar_lea.sflag [#allocation3], 1
    %1732 = vsyncpa %s1731, 1
    %1733 = vsyncpa [#allocation4], 1
    %s1734 = scalar_lea.sflag [#allocation4], 1
    %1735 = vsyncpa %s1734, 1

</llo_original>
